<compile_context>
chip_gen: v7x
topology: tpu7x:2x2x1
jax: 0.10.0
libtpu: 0.0.40
codegen_flags: <defaults>
</compile_context>

<pallas_src>
import math

import jax
import jax.numpy as jnp
from jax.experimental import pallas as pl
from jax.experimental.pallas import tpu as pltpu


def _mhsa_flash_kernel(num_heads, head_dim):
    scale = 1.0 / math.sqrt(head_dim)
    E = num_heads * head_dim

    def kernel(xq_ref, xkv_ref, wq_ref, bq_ref, wkv_ref, bkv_ref,
               wo_ref, bo_ref, o_ref, q_scr, m_scr, l_scr, acc_scr):
        ki = pl.program_id(2)

        @pl.when(ki == 0)
        def _init():
            # Q projection for this q-tile (done once per (b, qi)).
            xq = xq_ref[0]                                           # (TQ, E)
            q = jnp.dot(xq, wq_ref[...],
                        preferred_element_type=jnp.float32) + bq_ref[...]
            q = q * scale          # fold 1/sqrt(D) into Q once
            tq = xq.shape[0]
            q_scr[...] = q.reshape(tq, num_heads, head_dim).transpose(1, 0, 2)
            m_scr[...] = jnp.full(m_scr.shape, -jnp.inf, dtype=m_scr.dtype)
            l_scr[...] = jnp.zeros_like(l_scr)
            acc_scr[...] = jnp.zeros_like(acc_scr)

        # Fused K/V projection of the current kv-tile: one (TK,E)x(E,2E) matmul.
        xkv = xkv_ref[0]                                             # (TK, E)
        kv = jnp.dot(xkv, wkv_ref[...],
                     preferred_element_type=jnp.float32) + bkv_ref[...]  # (TK, 2E)
        tk = xkv.shape[0]
        k = kv[:, :E].reshape(tk, num_heads, head_dim).transpose(1, 0, 2)  # (H,TK,D)
        v = kv[:, E:].reshape(tk, num_heads, head_dim).transpose(1, 0, 2)  # (H,TK,D)

        # Batched-over-heads attention scores for this (q-tile, kv-tile) pair.
        q = q_scr[...]                                               # (H, TQ, D)
        s = jnp.einsum("hqd,hkd->hqk", q, k,
                       preferred_element_type=jnp.float32)           # (H, TQ, TK)

        # Online softmax update (flash-attention accumulator).
        m_prev = m_scr[...]                                          # (H, TQ, 1)
        m_new = jnp.maximum(m_prev, jnp.max(s, axis=-1, keepdims=True))
        alpha = jnp.exp(m_prev - m_new)
        p = jnp.exp(s - m_new)                                       # (H, TQ, TK)
        l_scr[...] = alpha * l_scr[...] + jnp.sum(p, axis=-1, keepdims=True)
        acc_scr[...] = alpha * acc_scr[...] + jnp.einsum(
            "hqk,hkd->hqd", p, v, preferred_element_type=jnp.float32)
        m_scr[...] = m_new

        @pl.when(ki == pl.num_programs(2) - 1)
        def _finalize():
            inv_l = pl.reciprocal(l_scr[...], approx=True)           # EUP slot
            o_heads = acc_scr[...] * inv_l                           # (H, TQ, D)
            tq = o_heads.shape[1]
            attn = o_heads.transpose(1, 0, 2).reshape(tq, E)         # (TQ, E)
            out = jnp.dot(attn, wo_ref[...],
                          preferred_element_type=jnp.float32) + bo_ref[...]
            o_ref[0] = out.astype(o_ref.dtype)                       # lane-dense store

    return kernel


def _pick_tile(dim, candidates):
    for c in candidates:
        if dim >= c and dim % c == 0:
            return c
    return dim


def multihead_self_attention(x, params, num_heads):
    """x: (B, S, E) float32.  params: dict of PyTorch-shaped weights/biases."""
    B, S, E = x.shape
    head_dim = E // num_heads
    assert head_dim * num_heads == E

    # Pre-transpose weights to (in, out) so the kernel never transposes, and
    # fuse K/V into one (E, 2E) weight / (1, 2E) bias.
    wq_t = params["wq"].T                                            # (E, E)
    wkv_t = jnp.concatenate([params["wk"].T, params["wv"].T], axis=1)  # (E, 2E)
    wo_t = params["wo"].T                                            # (E, E)
    bq = params["bq"].reshape(1, E)
    bkv = jnp.concatenate([params["bk"], params["bv"]]).reshape(1, 2 * E)
    bo = params["bo"].reshape(1, E)

    # Sequence tiling (degenerates to full S at small shapes).
    tq = _pick_tile(S, (256, 128))
    tk = _pick_tile(S, (512, 256, 128))
    n_q = S // tq
    n_kv = S // tk

    # Rough working-set estimate for the scoped VMEM limit (double-buffered
    # weights + tiles + scratch + score/intermediate slabs), clamped to a range
    # that is valid on v5e/v6e (128 MiB) and v7x (64 MiB).
    bpe = 4
    weight_bytes = 2 * (E * E + E * 2 * E + E * E + 4 * E) * bpe
    io_bytes = 2 * (tq * E + tk * E + tq * E) * bpe
    scratch_bytes = (2 * num_heads * tq * head_dim + 2 * num_heads * tq) * bpe
    interm_bytes = (3 * num_heads * tq * tk + 4 * tk * E + 2 * tq * E) * bpe
    est = weight_bytes + io_bytes + scratch_bytes + interm_bytes
    vmem_limit = int(min(max(2 * est, 32 * 1024 * 1024), 64 * 1024 * 1024))

    const_2d = lambda shape: pl.BlockSpec(shape, lambda b, qi, ki: (0, 0))

    return pl.pallas_call(
        _mhsa_flash_kernel(num_heads, head_dim),
        out_shape=jax.ShapeDtypeStruct((B, S, E), x.dtype),
        grid_spec=pltpu.PrefetchScalarGridSpec(
            num_scalar_prefetch=0,
            grid=(B, n_q, n_kv),
            in_specs=[
                pl.BlockSpec((1, tq, E), lambda b, qi, ki: (b, qi, 0)),  # x (query rows)
                pl.BlockSpec((1, tk, E), lambda b, qi, ki: (b, ki, 0)),  # x (key/value rows)
                const_2d((E, E)),      const_2d((1, E)),                 # q_proj (pre-T)
                const_2d((E, 2 * E)),  const_2d((1, 2 * E)),             # fused k/v proj
                const_2d((E, E)),      const_2d((1, E)),                 # out_proj (pre-T)
            ],
            out_specs=pl.BlockSpec((1, tq, E), lambda b, qi, ki: (b, qi, 0)),
            scratch_shapes=[
                pltpu.VMEM((num_heads, tq, head_dim), jnp.float32),   # Q (scaled)
                pltpu.VMEM((num_heads, tq, 1), jnp.float32),          # running max
                pltpu.VMEM((num_heads, tq, 1), jnp.float32),          # running sum
                pltpu.VMEM((num_heads, tq, head_dim), jnp.float32),   # output accumulator
            ],
        ),
        compiler_params=pltpu.CompilerParams(
            dimension_semantics=("parallel", "parallel", "arbitrary"),
            vmem_limit_bytes=vmem_limit),
    )(x, x, wq_t, bq, wkv_t, bkv, wo_t, bo)


def _reference(x, params, num_heads):
    """Pure-JAX reference mirroring the PyTorch forward exactly."""
    B, S, E = x.shape
    D = E // num_heads

    def lin(t, w, b):
        return t @ w.T + b

    q = lin(x, params["wq"], params["bq"])
    k = lin(x, params["wk"], params["bk"])
    v = lin(x, params["wv"], params["bv"])

    def split(t):  # (B, S, E) -> (B, H, S, D)
        return t.reshape(B, S, num_heads, D).transpose(0, 2, 1, 3)

    q, k, v = split(q), split(k), split(v)
    scores = jnp.einsum("bhsd,bhtd->bhst", q, k) / math.sqrt(D)
    w = jax.nn.softmax(scores, axis=-1)
    o = jnp.einsum("bhst,bhtd->bhsd", w, v)
    o = o.transpose(0, 2, 1, 3).reshape(B, S, E)
    return lin(o, params["wo"], params["bo"])


if __name__ == "__main__":
    B, S, E, H = 2, 8, 32, 4

    key = jax.random.PRNGKey(0)
    keys = jax.random.split(key, 9)
    bound = 1.0 / math.sqrt(E)  # PyTorch nn.Linear default init range

    params = {
        "wq": jax.random.uniform(keys[0], (E, E), jnp.float32, -bound, bound),
        "bq": jax.random.uniform(keys[1], (E,), jnp.float32, -bound, bound),
        "wk": jax.random.uniform(keys[2], (E, E), jnp.float32, -bound, bound),
        "bk": jax.random.uniform(keys[3], (E,), jnp.float32, -bound, bound),
        "wv": jax.random.uniform(keys[4], (E, E), jnp.float32, -bound, bound),
        "bv": jax.random.uniform(keys[5], (E,), jnp.float32, -bound, bound),
        "wo": jax.random.uniform(keys[6], (E, E), jnp.float32, -bound, bound),
        "bo": jax.random.uniform(keys[7], (E,), jnp.float32, -bound, bound),
    }
    x = jax.random.normal(keys[8], (B, S, E), jnp.float32)

    out = multihead_self_attention(x, params, H)
    out = jax.block_until_ready(out)

    ref = _reference(x, params, H)
    assert out.shape == (B, S, E)
    # Tolerance accounts for the EUP approx-reciprocal softmax normalization.
    assert jnp.allclose(out, ref, atol=5e-3, rtol=5e-3), "mismatch vs reference"

    print("KERNEL_OK")
</pallas_src>

<mosaic_0001>
module attributes {stable_mosaic.version = 11 : i64} {
  func.func @kernel(%arg0: i32, %arg1: i32, %arg2: i32, %arg3: memref<1x8x32xf32, #tpu.memory_space<vmem>>, %arg4: memref<1x8x32xf32, #tpu.memory_space<vmem>>, %arg5: memref<32x32xf32, #tpu.memory_space<vmem>>, %arg6: memref<1x32xf32, #tpu.memory_space<vmem>>, %arg7: memref<32x64xf32, #tpu.memory_space<vmem>>, %arg8: memref<1x64xf32, #tpu.memory_space<vmem>>, %arg9: memref<32x32xf32, #tpu.memory_space<vmem>>, %arg10: memref<1x32xf32, #tpu.memory_space<vmem>>, %arg11: memref<1x8x32xf32, #tpu.memory_space<vmem>>, %arg12: memref<4x8x8xf32, #tpu.memory_space<vmem>>, %arg13: memref<4x8x1xf32, #tpu.memory_space<vmem>>, %arg14: memref<4x8x1xf32, #tpu.memory_space<vmem>>, %arg15: memref<4x8x8xf32, #tpu.memory_space<vmem>>) attributes {dimension_semantics = [#tpu.dimension_semantics<parallel>, #tpu.dimension_semantics<parallel>, #tpu.dimension_semantics<arbitrary>], iteration_bounds = array<i64: 2, 1, 1>, scalar_prefetch = 0 : i64, scratch_operands = 4 : i64, tpu.core_type = #tpu.core_type<tc>, window_params = [{transform_indices = @transform_0, window_bounds = array<i64: 1, 8, 32>}, {transform_indices = @transform_1, window_bounds = array<i64: 1, 8, 32>}, {pipeline_mode = #tpu.pipeline_mode<synchronous>, transform_indices = @transform_2, window_bounds = array<i64: 32, 32>}, {pipeline_mode = #tpu.pipeline_mode<synchronous>, transform_indices = @transform_3, window_bounds = array<i64: 1, 32>}, {pipeline_mode = #tpu.pipeline_mode<synchronous>, transform_indices = @transform_4, window_bounds = array<i64: 32, 64>}, {pipeline_mode = #tpu.pipeline_mode<synchronous>, transform_indices = @transform_5, window_bounds = array<i64: 1, 64>}, {pipeline_mode = #tpu.pipeline_mode<synchronous>, transform_indices = @transform_6, window_bounds = array<i64: 32, 32>}, {pipeline_mode = #tpu.pipeline_mode<synchronous>, transform_indices = @transform_7, window_bounds = array<i64: 1, 32>}, {transform_indices = @transform_8, window_bounds = array<i64: 1, 8, 32>}]} {
    %c0_i32 = arith.constant 0 : i32
    %0 = arith.cmpi eq, %arg2, %c0_i32 : i32
    %1 = arith.extui %0 : i1 to i32
    %c0_i32_0 = arith.constant 0 : i32
    %2 = arith.cmpi ne, %1, %c0_i32_0 : i32
    scf.if %2 {
      %c0_34 = arith.constant 0 : index
      %c0_35 = arith.constant 0 : index
      %c0_36 = arith.constant 0 : index
      %43 = vector.load %arg3[%c0_34, %c0_35, %c0_36] : memref<1x8x32xf32, #tpu.memory_space<vmem>>, vector<1x8x32xf32>
      %44 = vector.shape_cast %43 : vector<1x8x32xf32> to vector<8x32xf32>
      %c0_37 = arith.constant 0 : index
      %c0_38 = arith.constant 0 : index
      %45 = vector.load %arg5[%c0_37, %c0_38] : memref<32x32xf32, #tpu.memory_space<vmem>>, vector<32x32xf32>
      %cst_39 = arith.constant dense<0.000000e+00> : vector<8x32xf32>
      %46 = tpu.matmul %44, %45, %cst_39 {dimension_numbers = #tpu.dot_dimension_numbers<[1], [0], [0], [1], [0, 0, 1, 1], [], []>} : vector<8x32xf32>, vector<32x32xf32>, vector<8x32xf32> -> vector<8x32xf32>
      %c0_40 = arith.constant 0 : index
      %c0_41 = arith.constant 0 : index
      %47 = vector.load %arg6[%c0_40, %c0_41] : memref<1x32xf32, #tpu.memory_space<vmem>>, vector<1x32xf32>
      %48 = vector.broadcast %47 : vector<1x32xf32> to vector<8x32xf32>
      %49 = arith.addf %46, %48 : vector<8x32xf32>
      %cst_42 = arith.constant 0.353553385 : f32
      %50 = vector.broadcast %cst_42 : f32 to vector<8x32xf32>
      %51 = arith.mulf %49, %50 : vector<8x32xf32>
      %52 = vector.shape_cast %51 : vector<8x32xf32> to vector<8x4x8xf32>
      %53 = tpu.transpose %52, [1, 0, 2] : vector<8x4x8xf32> -> vector<4x8x8xf32>
      %c0_43 = arith.constant 0 : index
      %c0_44 = arith.constant 0 : index
      %c0_45 = arith.constant 0 : index
      %54 = vector.load %arg12[%c0_43, %c0_44, %c0_45] : memref<4x8x8xf32, #tpu.memory_space<vmem>>, vector<4x8x8xf32>
      tpu.vector_store %arg12[%c0_43, %c0_44, %c0_45], %53 {strides = array<i32>} : memref<4x8x8xf32, #tpu.memory_space<vmem>>, vector<4x8x8xf32>,
      %cst_46 = arith.constant 0xFF800000 : f32
      %55 = vector.broadcast %cst_46 : f32 to vector<4x8x1xf32>
      %c0_47 = arith.constant 0 : index
      %c0_48 = arith.constant 0 : index
      %c0_49 = arith.constant 0 : index
      %56 = vector.load %arg13[%c0_47, %c0_48, %c0_49] : memref<4x8x1xf32, #tpu.memory_space<vmem>>, vector<4x8x1xf32>
      tpu.vector_store %arg13[%c0_47, %c0_48, %c0_49], %55 {strides = array<i32>} : memref<4x8x1xf32, #tpu.memory_space<vmem>>, vector<4x8x1xf32>,
      %cst_50 = arith.constant 0.000000e+00 : f32
      %57 = vector.broadcast %cst_50 : f32 to vector<4x8x1xf32>
      %c0_51 = arith.constant 0 : index
      %c0_52 = arith.constant 0 : index
      %c0_53 = arith.constant 0 : index
      %58 = vector.load %arg14[%c0_51, %c0_52, %c0_53] : memref<4x8x1xf32, #tpu.memory_space<vmem>>, vector<4x8x1xf32>
      tpu.vector_store %arg14[%c0_51, %c0_52, %c0_53], %57 {strides = array<i32>} : memref<4x8x1xf32, #tpu.memory_space<vmem>>, vector<4x8x1xf32>,
      %cst_54 = arith.constant 0.000000e+00 : f32
      %59 = vector.broadcast %cst_54 : f32 to vector<4x8x8xf32>
      %c0_55 = arith.constant 0 : index
      %c0_56 = arith.constant 0 : index
      %c0_57 = arith.constant 0 : index
      %60 = vector.load %arg15[%c0_55, %c0_56, %c0_57] : memref<4x8x8xf32, #tpu.memory_space<vmem>>, vector<4x8x8xf32>
      tpu.vector_store %arg15[%c0_55, %c0_56, %c0_57], %59 {strides = array<i32>} : memref<4x8x8xf32, #tpu.memory_space<vmem>>, vector<4x8x8xf32>,
    } else {
    }
    %c0 = arith.constant 0 : index
    %c0_1 = arith.constant 0 : index
    %c0_2 = arith.constant 0 : index
    %3 = vector.load %arg4[%c0, %c0_1, %c0_2] : memref<1x8x32xf32, #tpu.memory_space<vmem>>, vector<1x8x32xf32>
    %4 = vector.shape_cast %3 : vector<1x8x32xf32> to vector<8x32xf32>
    %c0_3 = arith.constant 0 : index
    %c0_4 = arith.constant 0 : index
    %5 = vector.load %arg7[%c0_3, %c0_4] : memref<32x64xf32, #tpu.memory_space<vmem>>, vector<32x64xf32>
    %cst = arith.constant dense<0.000000e+00> : vector<8x64xf32>
    %6 = tpu.matmul %4, %5, %cst {dimension_numbers = #tpu.dot_dimension_numbers<[1], [0], [0], [1], [0, 0, 1, 1], [], []>} : vector<8x32xf32>, vector<32x64xf32>, vector<8x64xf32> -> vector<8x64xf32>
    %c0_5 = arith.constant 0 : index
    %c0_6 = arith.constant 0 : index
    %7 = vector.load %arg8[%c0_5, %c0_6] : memref<1x64xf32, #tpu.memory_space<vmem>>, vector<1x64xf32>
    %8 = vector.broadcast %7 : vector<1x64xf32> to vector<8x64xf32>
    %9 = arith.addf %6, %8 : vector<8x64xf32>
    %10 = vector.extract_strided_slice %9 {offsets = [0, 0], sizes = [8, 32], strides = [1, 1]} : vector<8x64xf32> to vector<8x32xf32>
    %11 = vector.shape_cast %10 : vector<8x32xf32> to vector<8x4x8xf32>
    %12 = tpu.transpose %11, [1, 0, 2] : vector<8x4x8xf32> -> vector<4x8x8xf32>
    %13 = vector.extract_strided_slice %9 {offsets = [0, 32], sizes = [8, 32], strides = [1, 1]} : vector<8x64xf32> to vector<8x32xf32>
    %14 = vector.shape_cast %13 : vector<8x32xf32> to vector<8x4x8xf32>
    %15 = tpu.transpose %14, [1, 0, 2] : vector<8x4x8xf32> -> vector<4x8x8xf32>
    %c0_7 = arith.constant 0 : index
    %c0_8 = arith.constant 0 : index
    %c0_9 = arith.constant 0 : index
    %16 = vector.load %arg12[%c0_7, %c0_8, %c0_9] : memref<4x8x8xf32, #tpu.memory_space<vmem>>, vector<4x8x8xf32>
    "tpu.trace_start"() <{level = 10 : i32, message = "hqd,hkd->hqk"}> : () -> ()
    %cst_10 = arith.constant dense<0.000000e+00> : vector<4x8x8xf32>
    %17 = tpu.matmul %16, %12, %cst_10 {dimension_numbers = #tpu.dot_dimension_numbers<[2], [2], [1], [1], [0, 0, 0, 1, 1, 1], [0], [0]>} : vector<4x8x8xf32>, vector<4x8x8xf32>, vector<4x8x8xf32> -> vector<4x8x8xf32>
    "tpu.trace_stop"() : () -> ()
    %c0_11 = arith.constant 0 : index
    %c0_12 = arith.constant 0 : index
    %c0_13 = arith.constant 0 : index
    %18 = vector.load %arg13[%c0_11, %c0_12, %c0_13] : memref<4x8x1xf32, #tpu.memory_space<vmem>>, vector<4x8x1xf32>
    %cst_14 = arith.constant dense<0xFF800000> : vector<4x8xf32>
    %19 = vector.multi_reduction <maximumf>, %17, %cst_14 [2] : vector<4x8x8xf32> to vector<4x8xf32>
    %20 = vector.shape_cast %19 : vector<4x8xf32> to vector<4x8x1xf32>
    %21 = arith.maximumf %18, %20 : vector<4x8x1xf32>
    %22 = arith.subf %18, %21 : vector<4x8x1xf32>
    %23 = math.exp %22 : vector<4x8x1xf32>
    %24 = vector.broadcast %21 : vector<4x8x1xf32> to vector<4x8x8xf32>
    %25 = arith.subf %17, %24 : vector<4x8x8xf32>
    %26 = math.exp %25 : vector<4x8x8xf32>
    %c0_15 = arith.constant 0 : index
    %c0_16 = arith.constant 0 : index
    %c0_17 = arith.constant 0 : index
    %27 = vector.load %arg14[%c0_15, %c0_16, %c0_17] : memref<4x8x1xf32, #tpu.memory_space<vmem>>, vector<4x8x1xf32>
    %28 = arith.mulf %23, %27 : vector<4x8x1xf32>
    %cst_18 = arith.constant dense<0.000000e+00> : vector<4x8xf32>
    %29 = vector.multi_reduction <add>, %26, %cst_18 [2] : vector<4x8x8xf32> to vector<4x8xf32>
    %30 = vector.shape_cast %29 : vector<4x8xf32> to vector<4x8x1xf32>
    %31 = arith.addf %28, %30 : vector<4x8x1xf32>
    %c0_19 = arith.constant 0 : index
    %c0_20 = arith.constant 0 : index
    %c0_21 = arith.constant 0 : index
    %32 = vector.load %arg14[%c0_19, %c0_20, %c0_21] : memref<4x8x1xf32, #tpu.memory_space<vmem>>, vector<4x8x1xf32>
    tpu.vector_store %arg14[%c0_19, %c0_20, %c0_21], %31 {strides = array<i32>} : memref<4x8x1xf32, #tpu.memory_space<vmem>>, vector<4x8x1xf32>,
    %c0_22 = arith.constant 0 : index
    %c0_23 = arith.constant 0 : index
    %c0_24 = arith.constant 0 : index
    %33 = vector.load %arg15[%c0_22, %c0_23, %c0_24] : memref<4x8x8xf32, #tpu.memory_space<vmem>>, vector<4x8x8xf32>
    %34 = vector.broadcast %23 : vector<4x8x1xf32> to vector<4x8x8xf32>
    %35 = arith.mulf %34, %33 : vector<4x8x8xf32>
    "tpu.trace_start"() <{level = 10 : i32, message = "hqk,hkd->hqd"}> : () -> ()
    %cst_25 = arith.constant dense<0.000000e+00> : vector<4x8x8xf32>
    %36 = tpu.matmul %26, %15, %cst_25 {dimension_numbers = #tpu.dot_dimension_numbers<[2], [1], [1], [2], [0, 0, 0, 1, 1, 2], [0], [0]>} : vector<4x8x8xf32>, vector<4x8x8xf32>, vector<4x8x8xf32> -> vector<4x8x8xf32>
    "tpu.trace_stop"() : () -> ()
    %37 = arith.addf %35, %36 : vector<4x8x8xf32>
    %c0_26 = arith.constant 0 : index
    %c0_27 = arith.constant 0 : index
    %c0_28 = arith.constant 0 : index
    %38 = vector.load %arg15[%c0_26, %c0_27, %c0_28] : memref<4x8x8xf32, #tpu.memory_space<vmem>>, vector<4x8x8xf32>
    tpu.vector_store %arg15[%c0_26, %c0_27, %c0_28], %37 {strides = array<i32>} : memref<4x8x8xf32, #tpu.memory_space<vmem>>, vector<4x8x8xf32>,
    %c0_29 = arith.constant 0 : index
    %c0_30 = arith.constant 0 : index
    %c0_31 = arith.constant 0 : index
    %39 = vector.load %arg13[%c0_29, %c0_30, %c0_31] : memref<4x8x1xf32, #tpu.memory_space<vmem>>, vector<4x8x1xf32>
    tpu.vector_store %arg13[%c0_29, %c0_30, %c0_31], %21 {strides = array<i32>} : memref<4x8x1xf32, #tpu.memory_space<vmem>>, vector<4x8x1xf32>,
    %c0_i32_32 = arith.constant 0 : i32
    %40 = arith.cmpi eq, %arg2, %c0_i32_32 : i32
    %41 = arith.extui %40 : i1 to i32
    %c0_i32_33 = arith.constant 0 : i32
    %42 = arith.cmpi ne, %41, %c0_i32_33 : i32
    scf.if %42 {
      %c0_34 = arith.constant 0 : index
      %c0_35 = arith.constant 0 : index
      %c0_36 = arith.constant 0 : index
      %43 = vector.load %arg14[%c0_34, %c0_35, %c0_36] : memref<4x8x1xf32, #tpu.memory_space<vmem>>, vector<4x8x1xf32>
      %44 = tpu.reciprocal %43 {approx = true} : vector<4x8x1xf32> -> vector<4x8x1xf32>
      %c0_37 = arith.constant 0 : index
      %c0_38 = arith.constant 0 : index
      %c0_39 = arith.constant 0 : index
      %45 = vector.load %arg15[%c0_37, %c0_38, %c0_39] : memref<4x8x8xf32, #tpu.memory_space<vmem>>, vector<4x8x8xf32>
      %46 = vector.broadcast %44 : vector<4x8x1xf32> to vector<4x8x8xf32>
      %47 = arith.mulf %45, %46 : vector<4x8x8xf32>
      %48 = tpu.transpose %47, [1, 0, 2] : vector<4x8x8xf32> -> vector<8x4x8xf32>
      %49 = vector.shape_cast %48 : vector<8x4x8xf32> to vector<8x32xf32>
      %c0_40 = arith.constant 0 : index
      %c0_41 = arith.constant 0 : index
      %50 = vector.load %arg9[%c0_40, %c0_41] : memref<32x32xf32, #tpu.memory_space<vmem>>, vector<32x32xf32>
      %cst_42 = arith.constant dense<0.000000e+00> : vector<8x32xf32>
      %51 = tpu.matmul %49, %50, %cst_42 {dimension_numbers = #tpu.dot_dimension_numbers<[1], [0], [0], [1], [0, 0, 1, 1], [], []>} : vector<8x32xf32>, vector<32x32xf32>, vector<8x32xf32> -> vector<8x32xf32>
      %c0_43 = arith.constant 0 : index
      %c0_44 = arith.constant 0 : index
      %52 = vector.load %arg10[%c0_43, %c0_44] : memref<1x32xf32, #tpu.memory_space<vmem>>, vector<1x32xf32>
      %53 = vector.broadcast %52 : vector<1x32xf32> to vector<8x32xf32>
      %54 = arith.addf %51, %53 : vector<8x32xf32>
      %c0_45 = arith.constant 0 : index
      %c0_46 = arith.constant 0 : index
      %c0_47 = arith.constant 0 : index
      %55 = vector.load %arg11[%c0_45, %c0_46, %c0_47] : memref<1x8x32xf32, #tpu.memory_space<vmem>>, vector<1x8x32xf32>
      %56 = vector.shape_cast %55 : vector<1x8x32xf32> to vector<8x32xf32>
      %57 = vector.shape_cast %54 : vector<8x32xf32> to vector<1x8x32xf32>
      tpu.vector_store %arg11[%c0_45, %c0_46, %c0_47], %57 {strides = array<i32>} : memref<1x8x32xf32, #tpu.memory_space<vmem>>, vector<1x8x32xf32>,
    } else {
    }
    return
  }
  func.func @transform_0(%arg0: i32, %arg1: i32, %arg2: i32) -> (i32, i32, i32) {
    %c0_i32 = arith.constant 0 : i32
    %c0_i32_0 = arith.constant 0 : i32
    return %arg0, %arg1, %c0_i32 : i32, i32, i32
  }
  func.func @transform_1(%arg0: i32, %arg1: i32, %arg2: i32) -> (i32, i32, i32) {
    %c0_i32 = arith.constant 0 : i32
    %c0_i32_0 = arith.constant 0 : i32
    return %arg0, %arg2, %c0_i32 : i32, i32, i32
  }
  func.func @transform_2(%arg0: i32, %arg1: i32, %arg2: i32) -> (i32, i32) {
    %c0_i32 = arith.constant 0 : i32
    %c0_i32_0 = arith.constant 0 : i32
    %c0_i32_1 = arith.constant 0 : i32
    return %c0_i32, %c0_i32_0 : i32, i32
  }
  func.func @transform_3(%arg0: i32, %arg1: i32, %arg2: i32) -> (i32, i32) {
    %c0_i32 = arith.constant 0 : i32
    %c0_i32_0 = arith.constant 0 : i32
    %c0_i32_1 = arith.constant 0 : i32
    return %c0_i32, %c0_i32_0 : i32, i32
  }
  func.func @transform_4(%arg0: i32, %arg1: i32, %arg2: i32) -> (i32, i32) {
    %c0_i32 = arith.constant 0 : i32
    %c0_i32_0 = arith.constant 0 : i32
    %c0_i32_1 = arith.constant 0 : i32
    return %c0_i32, %c0_i32_0 : i32, i32
  }
  func.func @transform_5(%arg0: i32, %arg1: i32, %arg2: i32) -> (i32, i32) {
    %c0_i32 = arith.constant 0 : i32
    %c0_i32_0 = arith.constant 0 : i32
    %c0_i32_1 = arith.constant 0 : i32
    return %c0_i32, %c0_i32_0 : i32, i32
  }
  func.func @transform_6(%arg0: i32, %arg1: i32, %arg2: i32) -> (i32, i32) {
    %c0_i32 = arith.constant 0 : i32
    %c0_i32_0 = arith.constant 0 : i32
    %c0_i32_1 = arith.constant 0 : i32
    return %c0_i32, %c0_i32_0 : i32, i32
  }
  func.func @transform_7(%arg0: i32, %arg1: i32, %arg2: i32) -> (i32, i32) {
    %c0_i32 = arith.constant 0 : i32
    %c0_i32_0 = arith.constant 0 : i32
    %c0_i32_1 = arith.constant 0 : i32
    return %c0_i32, %c0_i32_0 : i32, i32
  }
  func.func @transform_8(%arg0: i32, %arg1: i32, %arg2: i32) -> (i32, i32, i32) {
    %c0_i32 = arith.constant 0 : i32
    %c0_i32_0 = arith.constant 0 : i32
    return %arg0, %arg1, %c0_i32 : i32, i32, i32
  }
}

</mosaic_0001>

<llo_original>
// kernel: tpu_custom_call.1
$region0: #{tpu_custom_call.1}
  #allocation0 [shape = 'u32[]', space=smem, size = 0x4, offset = 0x4, fixed_abs, tag = 'smem constant byte address 0x4 - core index']
  #allocation1 [shape = 'u32[144,128]{1,0:T(1,128)}', space=vmem, size = 0x12000, scoped, tag = 'internal scratch']
  #allocation2 [shape = 'f32[4,8,8]{2,1,0:T(8,128)}', space=vmem, size = 0x4000, scoped, tag = 'scratch operand']
  #allocation3 [shape = 'f32[4,8,1]{2,1,0:T(8,128)}', space=vmem, size = 0x4000, scoped, tag = 'scratch operand']
  #allocation4 [shape = 'f32[4,8,1]{2,1,0:T(8,128)}', space=vmem, size = 0x4000, scoped, tag = 'scratch operand']
  #allocation5 [shape = 'f32[4,8,8]{2,1,0:T(8,128)}', space=vmem, size = 0x4000, scoped, tag = 'scratch operand']
  %s0 = inlined_call_operand.hbm [shape: f32[2,8,32], index: 0, kind: input, shape index: {}]
  %s1 = inlined_call_operand.hbm [shape: f32[2,8,32], index: 1, kind: input, shape index: {}]
  %s2 = inlined_call_operand.hbm [shape: f32[32,32], index: 2, kind: input, shape index: {}]
  %s3 = inlined_call_operand.vmem [shape: f32[1,32], index: 3, kind: input, shape index: {}]
  %s4 = inlined_call_operand.hbm [shape: f32[32,64], index: 4, kind: input, shape index: {}]
  %s5 = inlined_call_operand.vmem [shape: f32[1,64], index: 5, kind: input, shape index: {}]
  %s6 = inlined_call_operand.hbm [shape: f32[32,32], index: 6, kind: input, shape index: {}]
  %s7 = inlined_call_operand.vmem [shape: f32[1,32], index: 7, kind: input, shape index: {}]
  %s8 = inlined_call_operand.hbm [shape: f32[2,8,32], index: 8, kind: output, shape index: {}]
  %s9 = sld [smem:[#allocation0]]
  $region93: #{tpu_custom_call.1} parent=0
    _
  %s11 = ssub.s32 1, %s9
  %s12 = scalar_select 0, %s11, %s9
  $region1: #{tpu_custom_call.1} parent=0
    #allocation6 [shape = 'u8[8192]{0}', space=vmem, size = 0x2000, scoped, tag = 'input window, operand 0']
    #allocation7 [shape = 's32[2]{0}', space=sflag, size = 0x8, scoped, tag = 'scoped memory for tpu_custom_call.1']
    #allocation8 [shape = 's32[2]{0}', space=sflag, size = 0x8, scoped, tag = 'scoped memory for tpu_custom_call.1']
    #allocation9 [shape = 'u8[8192]{0}', space=vmem, size = 0x2000, scoped, tag = 'input window, operand 1']
    #allocation10 [shape = 's32[2]{0}', space=sflag, size = 0x8, scoped, tag = 'scoped memory for tpu_custom_call.1']
    #allocation11 [shape = 'u8[16384]{0}', space=vmem, size = 0x4000, scoped, tag = 'input window, operand 2, single buffered']
    #allocation12 [shape = 'u8[16384]{0}', space=vmem, size = 0x4000, scoped, tag = 'input window, operand 4, single buffered']
    #allocation13 [shape = 's32[1]{0}', space=sflag, size = 0x4, scoped, tag = 'scoped memory for tpu_custom_call.1']
    #allocation14 [shape = 'u8[16384]{0}', space=vmem, size = 0x4000, scoped, tag = 'input window, operand 6, single buffered']
    #allocation15 [shape = 'u8[8192]{0}', space=vmem, size = 0x2000, scoped, tag = 'output window, operand 0']
    %13 = vsyncpa [#allocation7], 0
    %s14 = scalar_lea.sflag [#allocation7], 1
    %15 = vsyncpa %s14, 0
    %16 = vsyncpa [#allocation10], 0
    %s17 = scalar_lea.sflag [#allocation10], 1
    %18 = vsyncpa %s17, 0
    %19 = vsyncpa [#allocation13], 0
    %20 = vsyncpa [#allocation8], 0
    %s21 = scalar_lea.sflag [#allocation8], 1
    %22 = vsyncpa %s21, 0
    loop: start=0, step=1, limit=4
    $region2: #{tpu_custom_call.1} parent=1 // loop_pre_header
      _
    $region3: #{tpu_custom_call.1} parent=1 // loop_header
      %s24 = sphi 0, %s28
      %p25 = scmp.ge.s32.totalorder %s24, 4
      %s31 = sphi 0, %s50
      %s32 = sphi 0, %s46
      %s33 = sphi 0, %s42
      %s34 = sphi 0, %s31
      %s35 = sphi 0, %s32
      %s36 = sphi 0, %s33
      %s37 = sphi 0, %s34
      %s38 = sphi 0, %s35
      %s39 = sphi 0, %s36
      %s55 = sphi 0, %s57
      %s58 = sphi 0, %s55
      %s59 = sphi 0, %s58
      %s75 = sphi 0, %s59
      %s83 = sphi 0, %s85
      %s86 = sphi 0, %s83
      %s87 = sphi 0, %s86
      %s103 = sphi 0, %s87
      %s107 = sphi 0, %s107
      %s109 = sphi 0, %s107
      %s110 = sphi 0, %s109
      %s124 = sphi 0, %s110
      %s128 = sphi 0, %s128
      %s130 = sphi 0, %s128
      %s131 = sphi 0, %s130
      %s145 = sphi 0, %s131
      %s149 = sphi 0, %s149
      %s151 = sphi 0, %s149
      %s152 = sphi 0, %s151
      %s166 = sphi 0, %s152
      %s170 = sphi 0, %s170
      %s172 = sphi 0, %s170
      %s173 = sphi 0, %s172
      %s187 = sphi 0, %s173
      %s191 = sphi 0, %s191
      %s193 = sphi 0, %s191
      %s194 = sphi 0, %s193
      %s208 = sphi 0, %s194
      %s212 = sphi 0, %s212
      %s214 = sphi 0, %s212
      %s215 = sphi 0, %s214
      %s229 = sphi 0, %s215
      %s237 = sphi 0, %s239
      %s240 = sphi 0, %s237
      %s241 = sphi 0, %s240
      %s257 = sphi 0, %s241
    $region4: #{tpu_custom_call.1} parent=1 // loop_header_branch
      %27 = sbr.rel (%p25) target = $region8
    $region5: #{tpu_custom_call.1} parent=1 // loop_body
      %s29 = ssub.s32 %s24, 1
      %s30 = ssub.s32 %s24, 2
      %s40 = sadd.s32 1, %s33
      %p41 = scmp.ge.s32.totalorder %s40, 1
      %s42 = scalar_select %p41, 0, %s40
      %s43 = sadd.s32 1, %s32
      %s44 = scalar_select %p41, %s43, %s32
      %p45 = scmp.ge.s32.totalorder %s44, 1
      %s46 = scalar_select %p45, 0, %s44
      %s47 = sadd.s32 1, %s31
      %s48 = scalar_select %p45, %s47, %s31
      %p49 = scmp.ge.s32.totalorder %s48, 2
      %s50 = scalar_select %p49, 0, %s48
      %s51 = ssub.s32 %s31, %s50
      %s52 = ssub.s32 %s32, %s46
      %s53 = sor.u32 %s51, %s52
      %p54 = scmp.eq.s32.totalorder %s53, 0
      %s56 = sadd.s32 %s55, 1
      %s57 = scalar_select %p54, %s55, %s56
      %p60 = pneg %p54
      %p61 = scmp.eq.s32.totalorder %s24, 1
      %p62 = por %p60, %p61
      %p63 = scmp.ne.s32.totalorder %s55, %s58
      %p64 = scmp.eq.s32.totalorder %s24, 0
      %p65 = por %p63, %p64
      %p66 = scmp.ne.s32.totalorder %s55, %s58
      %p67 = scmp.eq.s32.totalorder %s29, 1
      %p68 = por %p66, %p67
      %p69 = scmp.ne.s32.totalorder %s58, %s59
      %p70 = scmp.eq.s32.totalorder %s29, 0
      %p71 = por %p69, %p70
      %p72 = scmp.ne.s32.totalorder %s58, %s59
      %p73 = scmp.eq.s32.totalorder %s30, 1
      %p74 = por %p72, %p73
      %p76 = scmp.ne.s32.totalorder %s59, %s75
      %p77 = scmp.eq.s32.totalorder %s30, 0
      %p78 = por %p76, %p77
      %s79 = ssub.s32 %s31, %s50
      %s80 = ssub.s32 %s33, %s42
      %s81 = sor.u32 %s79, %s80
      %p82 = scmp.eq.s32.totalorder %s81, 0
      %s84 = sadd.s32 %s83, 1
      %s85 = scalar_select %p82, %s83, %s84
      %p88 = pneg %p82
      %p89 = scmp.eq.s32.totalorder %s24, 1
      %p90 = por %p88, %p89
      %p91 = scmp.ne.s32.totalorder %s83, %s86
      %p92 = scmp.eq.s32.totalorder %s24, 0
      %p93 = por %p91, %p92
      %p94 = scmp.ne.s32.totalorder %s83, %s86
      %p95 = scmp.eq.s32.totalorder %s29, 1
      %p96 = por %p94, %p95
      %p97 = scmp.ne.s32.totalorder %s86, %s87
      %p98 = scmp.eq.s32.totalorder %s29, 0
      %p99 = por %p97, %p98
      %p100 = scmp.ne.s32.totalorder %s86, %s87
      %p101 = scmp.eq.s32.totalorder %s30, 1
      %p102 = por %p100, %p101
      %p104 = scmp.ne.s32.totalorder %s87, %s103
      %p105 = scmp.eq.s32.totalorder %s30, 0
      %p106 = por %p104, %p105
      %s108 = sadd.s32 %s107, 1
      %p111 = scmp.eq.s32.totalorder %s24, 1
      %p112 = scmp.ne.s32.totalorder %s107, %s109
      %p113 = scmp.eq.s32.totalorder %s24, 0
      %p114 = por %p112, %p113
      %p115 = scmp.ne.s32.totalorder %s107, %s109
      %p116 = scmp.eq.s32.totalorder %s29, 1
      %p117 = por %p115, %p116
      %p118 = scmp.ne.s32.totalorder %s109, %s110
      %p119 = scmp.eq.s32.totalorder %s29, 0
      %p120 = por %p118, %p119
      %p121 = scmp.ne.s32.totalorder %s109, %s110
      %p122 = scmp.eq.s32.totalorder %s30, 1
      %p123 = por %p121, %p122
      %p125 = scmp.ne.s32.totalorder %s110, %s124
      %p126 = scmp.eq.s32.totalorder %s30, 0
      %p127 = por %p125, %p126
      %s129 = sadd.s32 %s128, 1
      %p132 = scmp.eq.s32.totalorder %s24, 1
      %p133 = scmp.ne.s32.totalorder %s128, %s130
      %p134 = scmp.eq.s32.totalorder %s24, 0
      %p135 = por %p133, %p134
      %p136 = scmp.ne.s32.totalorder %s128, %s130
      %p137 = scmp.eq.s32.totalorder %s29, 1
      %p138 = por %p136, %p137
      %p139 = scmp.ne.s32.totalorder %s130, %s131
      %p140 = scmp.eq.s32.totalorder %s29, 0
      %p141 = por %p139, %p140
      %p142 = scmp.ne.s32.totalorder %s130, %s131
      %p143 = scmp.eq.s32.totalorder %s30, 1
      %p144 = por %p142, %p143
      %p146 = scmp.ne.s32.totalorder %s131, %s145
      %p147 = scmp.eq.s32.totalorder %s30, 0
      %p148 = por %p146, %p147
      %s150 = sadd.s32 %s149, 1
      %p153 = scmp.eq.s32.totalorder %s24, 1
      %p154 = scmp.ne.s32.totalorder %s149, %s151
      %p155 = scmp.eq.s32.totalorder %s24, 0
      %p156 = por %p154, %p155
      %p157 = scmp.ne.s32.totalorder %s149, %s151
      %p158 = scmp.eq.s32.totalorder %s29, 1
      %p159 = por %p157, %p158
      %p160 = scmp.ne.s32.totalorder %s151, %s152
      %p161 = scmp.eq.s32.totalorder %s29, 0
      %p162 = por %p160, %p161
      %p163 = scmp.ne.s32.totalorder %s151, %s152
      %p164 = scmp.eq.s32.totalorder %s30, 1
      %p165 = por %p163, %p164
      %p167 = scmp.ne.s32.totalorder %s152, %s166
      %p168 = scmp.eq.s32.totalorder %s30, 0
      %p169 = por %p167, %p168
      %s171 = sadd.s32 %s170, 1
      %p174 = scmp.eq.s32.totalorder %s24, 1
      %p175 = scmp.ne.s32.totalorder %s170, %s172
      %p176 = scmp.eq.s32.totalorder %s24, 0
      %p177 = por %p175, %p176
      %p178 = scmp.ne.s32.totalorder %s170, %s172
      %p179 = scmp.eq.s32.totalorder %s29, 1
      %p180 = por %p178, %p179
      %p181 = scmp.ne.s32.totalorder %s172, %s173
      %p182 = scmp.eq.s32.totalorder %s29, 0
      %p183 = por %p181, %p182
      %p184 = scmp.ne.s32.totalorder %s172, %s173
      %p185 = scmp.eq.s32.totalorder %s30, 1
      %p186 = por %p184, %p185
      %p188 = scmp.ne.s32.totalorder %s173, %s187
      %p189 = scmp.eq.s32.totalorder %s30, 0
      %p190 = por %p188, %p189
      %s192 = sadd.s32 %s191, 1
      %p195 = scmp.eq.s32.totalorder %s24, 1
      %p196 = scmp.ne.s32.totalorder %s191, %s193
      %p197 = scmp.eq.s32.totalorder %s24, 0
      %p198 = por %p196, %p197
      %p199 = scmp.ne.s32.totalorder %s191, %s193
      %p200 = scmp.eq.s32.totalorder %s29, 1
      %p201 = por %p199, %p200
      %p202 = scmp.ne.s32.totalorder %s193, %s194
      %p203 = scmp.eq.s32.totalorder %s29, 0
      %p204 = por %p202, %p203
      %p205 = scmp.ne.s32.totalorder %s193, %s194
      %p206 = scmp.eq.s32.totalorder %s30, 1
      %p207 = por %p205, %p206
      %p209 = scmp.ne.s32.totalorder %s194, %s208
      %p210 = scmp.eq.s32.totalorder %s30, 0
      %p211 = por %p209, %p210
      %s213 = sadd.s32 %s212, 1
      %p216 = scmp.eq.s32.totalorder %s24, 1
      %p217 = scmp.ne.s32.totalorder %s212, %s214
      %p218 = scmp.eq.s32.totalorder %s24, 0
      %p219 = por %p217, %p218
      %p220 = scmp.ne.s32.totalorder %s212, %s214
      %p221 = scmp.eq.s32.totalorder %s29, 1
      %p222 = por %p220, %p221
      %p223 = scmp.ne.s32.totalorder %s214, %s215
      %p224 = scmp.eq.s32.totalorder %s29, 0
      %p225 = por %p223, %p224
      %p226 = scmp.ne.s32.totalorder %s214, %s215
      %p227 = scmp.eq.s32.totalorder %s30, 1
      %p228 = por %p226, %p227
      %p230 = scmp.ne.s32.totalorder %s215, %s229
      %p231 = scmp.eq.s32.totalorder %s30, 0
      %p232 = por %p230, %p231
      %s233 = ssub.s32 %s31, %s50
      %s234 = ssub.s32 %s32, %s46
      %s235 = sor.u32 %s233, %s234
      %p236 = scmp.eq.s32.totalorder %s235, 0
      %s238 = sadd.s32 %s237, 1
      %s239 = scalar_select %p236, %s237, %s238
      %p242 = pneg %p236
      %p243 = scmp.eq.s32.totalorder %s24, 1
      %p244 = por %p242, %p243
      %p245 = scmp.ne.s32.totalorder %s237, %s240
      %p246 = scmp.eq.s32.totalorder %s24, 0
      %p247 = por %p245, %p246
      %p248 = scmp.ne.s32.totalorder %s237, %s240
      %p249 = scmp.eq.s32.totalorder %s29, 1
      %p250 = por %p248, %p249
      %p251 = scmp.ne.s32.totalorder %s240, %s241
      %p252 = scmp.eq.s32.totalorder %s29, 0
      %p253 = por %p251, %p252
      %p254 = scmp.ne.s32.totalorder %s240, %s241
      %p255 = scmp.eq.s32.totalorder %s30, 1
      %p256 = por %p254, %p255
      %p258 = scmp.ne.s32.totalorder %s241, %s257
      %p259 = scmp.eq.s32.totalorder %s30, 0
      %p260 = por %p258, %p259
      %p261 = scmp.le.s32.totalorder 1, %s24
      %p262 = scmp.lt.s32.totalorder %s24, 3
      %p263 = pnand %p261, %p262
      %p264 = pneg %p263
      // Predicated region
      $region9: #{tpu_custom_call.1} parent=5 // pred_check
        _
      $region10: #{tpu_custom_call.1} parent=5 // pred_check_branch
        %266 = sbr.rel (%p263) target = $region12
      $region11: #{tpu_custom_call.1} parent=5 // pred_region
        %s267 = ssub.s32 %s24, 1
        // Predicated region
        $region13: #{tpu_custom_call.1} parent=11 // pred_check
          %p268 = pneg %p120
        $region14: #{tpu_custom_call.1} parent=11 // pred_check_branch
          %270 = sbr.rel (%p268) target = $region16
        $region15: #{tpu_custom_call.1} parent=11 // pred_region
          %s272 = ssub.s32 512, 512
          %273 = vsyncadd [#allocation10], %s272
          %s274 = sshll.u32 [#allocation11], 4
          %s275 = int_to_ptr.vmem [resolvable:$true] %s274
          %280 = dma.hbm_to_vmem [thread:$0]  %s2, 512, %s275, [#allocation10], 128, 128, 8
        $region16: #{tpu_custom_call.1} parent=11 // pred_fallthru
          _
        // Predicated region
        $region17: #{tpu_custom_call.1} parent=11 // pred_check
          %p281 = pneg %p141
        $region18: #{tpu_custom_call.1} parent=11 // pred_check_branch
          %283 = sbr.rel (%p281) target = $region20
        $region19: #{tpu_custom_call.1} parent=11 // pred_region
          _
        $region20: #{tpu_custom_call.1} parent=11 // pred_fallthru
          _
        // Predicated region
        $region21: #{tpu_custom_call.1} parent=11 // pred_check
          %p284 = pneg %p162
        $region22: #{tpu_custom_call.1} parent=11 // pred_check_branch
          %286 = sbr.rel (%p284) target = $region24
        $region23: #{tpu_custom_call.1} parent=11 // pred_region
          %s288 = ssub.s32 512, 512
          %289 = vsyncadd [#allocation13], %s288
          %s290 = sshll.u32 [#allocation12], 4
          %s291 = int_to_ptr.vmem [resolvable:$true] %s290
          %296 = dma.hbm_to_vmem [thread:$0]  %s4, 512, %s291, [#allocation13], 128, 128, 8
        $region24: #{tpu_custom_call.1} parent=11 // pred_fallthru
          _
        // Predicated region
        $region25: #{tpu_custom_call.1} parent=11 // pred_check
          %p297 = pneg %p183
        $region26: #{tpu_custom_call.1} parent=11 // pred_check_branch
          %299 = sbr.rel (%p297) target = $region28
        $region27: #{tpu_custom_call.1} parent=11 // pred_region
          _
        $region28: #{tpu_custom_call.1} parent=11 // pred_fallthru
          _
        // Predicated region
        $region29: #{tpu_custom_call.1} parent=11 // pred_check
          %p300 = pneg %p204
        $region30: #{tpu_custom_call.1} parent=11 // pred_check_branch
          %302 = sbr.rel (%p300) target = $region32
        $region31: #{tpu_custom_call.1} parent=11 // pred_region
          %s304 = ssub.s32 512, 512
          %305 = vsyncadd [#allocation13], %s304
          %s306 = sshll.u32 [#allocation14], 4
          %s307 = int_to_ptr.vmem [resolvable:$true] %s306
          %312 = dma.hbm_to_vmem [thread:$0]  %s6, 512, %s307, [#allocation13], 128, 128, 8
        $region32: #{tpu_custom_call.1} parent=11 // pred_fallthru
          _
        // Predicated region
        $region33: #{tpu_custom_call.1} parent=11 // pred_check
          %p313 = pneg %p225
        $region34: #{tpu_custom_call.1} parent=11 // pred_check_branch
          %315 = sbr.rel (%p313) target = $region36
        $region35: #{tpu_custom_call.1} parent=11 // pred_region
          _
        $region36: #{tpu_custom_call.1} parent=11 // pred_fallthru
          _
      $region12: #{tpu_custom_call.1} parent=5 // pred_fallthru
        _
      %p316 = scmp.lt.s32.totalorder %s24, 2
      // Predicated region
      $region37: #{tpu_custom_call.1} parent=5 // pred_check
        %p317 = pneg %p316
      $region38: #{tpu_custom_call.1} parent=5 // pred_check_branch
        %319 = sbr.rel (%p317) target = $region40
      $region39: #{tpu_custom_call.1} parent=5 // pred_region
        // Predicated region
        $region41: #{tpu_custom_call.1} parent=39 // pred_check
          %p320 = pneg %p65
        $region42: #{tpu_custom_call.1} parent=39 // pred_check_branch
          %322 = sbr.rel (%p320) target = $region44
        $region43: #{tpu_custom_call.1} parent=39 // pred_region
          %s323 = sand.u32 %s55, 1
          %s324 = scalar_lea.sflag [#allocation7], %s323
          %s325 = sand.u32 %s55, 1
          %s326 = smul.addr %s325, 8
          %s327 = scalar_lea.vmem [#allocation6], %s326
          %s329 = ssub.s32 128, 128
          %330 = vsyncadd %s324, %s329
          %s331 = sadd.s32 %s32, %s31
          %s332 = smul.addr %s331, 128
          %s333 = scalar_lea.hbm %s0, %s332
          %s335 = sshll.u32 %s327, 4
          %s336 = int_to_ptr.vmem [resolvable:$true] %s335
          %338 = dma.hbm_to_vmem [thread:$0]  %s333, 128, %s336, %s324
        $region44: #{tpu_custom_call.1} parent=39 // pred_fallthru
          _
        // Predicated region
        $region45: #{tpu_custom_call.1} parent=39 // pred_check
          %p339 = pneg %p93
        $region46: #{tpu_custom_call.1} parent=39 // pred_check_branch
          %341 = sbr.rel (%p339) target = $region48
        $region47: #{tpu_custom_call.1} parent=39 // pred_region
          %s342 = sand.u32 %s24, 1
          %s343 = scalar_lea.sflag [#allocation10], %s342
          %s344 = sand.u32 %s83, 1
          %s345 = smul.addr %s344, 8
          %s346 = scalar_lea.vmem [#allocation9], %s345
          %s348 = ssub.s32 128, 128
          %349 = vsyncadd %s343, %s348
          %s350 = sadd.s32 %s33, %s31
          %s351 = smul.addr %s350, 128
          %s352 = scalar_lea.hbm %s1, %s351
          %s354 = sshll.u32 %s346, 4
          %s355 = int_to_ptr.vmem [resolvable:$true] %s354
          %357 = dma.hbm_to_vmem [thread:$0]  %s352, 128, %s355, %s343
        $region48: #{tpu_custom_call.1} parent=39 // pred_fallthru
          _
      $region40: #{tpu_custom_call.1} parent=5 // pred_fallthru
        _
      %p358 = scmp.le.s32.totalorder 1, %s24
      %p359 = scmp.lt.s32.totalorder %s24, 3
      %p360 = pnand %p358, %p359
      %p361 = pneg %p360
      // Predicated region
      $region49: #{tpu_custom_call.1} parent=5 // pred_check
        _
      $region50: #{tpu_custom_call.1} parent=5 // pred_check_branch
        %363 = sbr.rel (%p360) target = $region52
      $region51: #{tpu_custom_call.1} parent=5 // pred_region
        %s364 = ssub.s32 %s24, 1
        %s365 = sand.u32 %s58, 1
        %s366 = scalar_lea.sflag [#allocation7], %s365
        %s367 = sand.u32 %s58, 1
        %s368 = smul.addr %s367, 8
        %s369 = scalar_lea.vmem [#allocation6], %s368
        // Predicated region
        $region53: #{tpu_custom_call.1} parent=51 // pred_check
          %p370 = pneg %p71
        $region54: #{tpu_custom_call.1} parent=51 // pred_check_branch
          %372 = sbr.rel (%p370) target = $region56
        $region55: #{tpu_custom_call.1} parent=51 // pred_region
          %373 = dma.done %s366, 128
        $region56: #{tpu_custom_call.1} parent=51 // pred_fallthru
          _
        %s374 = sand.u32 %s29, 1
        %s375 = scalar_lea.sflag [#allocation10], %s374
        %s376 = sand.u32 %s86, 1
        %s377 = smul.addr %s376, 8
        %s378 = scalar_lea.vmem [#allocation9], %s377
        // Predicated region
        $region57: #{tpu_custom_call.1} parent=51 // pred_check
          %p379 = pneg %p99
        $region58: #{tpu_custom_call.1} parent=51 // pred_check_branch
          %381 = sbr.rel (%p379) target = $region60
        $region59: #{tpu_custom_call.1} parent=51 // pred_region
          %382 = dma.done %s375, 128
        $region60: #{tpu_custom_call.1} parent=51 // pred_fallthru
          _
        // Predicated region
        $region61: #{tpu_custom_call.1} parent=51 // pred_check
          %p383 = pneg %p120
        $region62: #{tpu_custom_call.1} parent=51 // pred_check_branch
          %385 = sbr.rel (%p383) target = $region64
        $region63: #{tpu_custom_call.1} parent=51 // pred_region
          %386 = dma.done [#allocation10], 512
        $region64: #{tpu_custom_call.1} parent=51 // pred_fallthru
          _
        // Predicated region
        $region65: #{tpu_custom_call.1} parent=51 // pred_check
          %p387 = pneg %p162
        $region66: #{tpu_custom_call.1} parent=51 // pred_check_branch
          %389 = sbr.rel (%p387) target = $region68
        $region67: #{tpu_custom_call.1} parent=51 // pred_region
          %390 = dma.done [#allocation13], 512
        $region68: #{tpu_custom_call.1} parent=51 // pred_fallthru
          _
        // Predicated region
        $region69: #{tpu_custom_call.1} parent=51 // pred_check
          %p391 = pneg %p204
        $region70: #{tpu_custom_call.1} parent=51 // pred_check_branch
          %393 = sbr.rel (%p391) target = $region72
        $region71: #{tpu_custom_call.1} parent=51 // pred_region
          %394 = dma.done [#allocation13], 512
        $region72: #{tpu_custom_call.1} parent=51 // pred_fallthru
          _
        %s395 = sand.u32 %s58, 1
        %s396 = scalar_lea.sflag [#allocation7], %s395
        %s397 = sand.u32 %s58, 1
        %s398 = smul.addr %s397, 8
        %s399 = scalar_lea.vmem [#allocation6], %s398
        %p400 = pneg %p71
        %p401 = pneg %p68
        %s402 = sand.u32 %s29, 1
        %s403 = scalar_lea.sflag [#allocation10], %s402
        %s404 = sand.u32 %s86, 1
        %s405 = smul.addr %s404, 8
        %s406 = scalar_lea.vmem [#allocation9], %s405
        %p407 = pneg %p99
        %p408 = pneg %p96
        %p409 = pneg %p120
        %p410 = pneg %p117
        %p411 = pneg %p141
        %p412 = pneg %p138
        %p413 = pneg %p162
        %p414 = pneg %p159
        %p415 = pneg %p183
        %p416 = pneg %p180
        %p417 = pneg %p204
        %p418 = pneg %p201
        %p419 = pneg %p225
        %p420 = pneg %p222
        %p421 = pneg %p253
        %p422 = pneg %p250
        %s423 = sand.u32 %s240, 1
        %s424 = scalar_lea.sflag [#allocation8], %s423
        %s425 = sand.u32 %s240, 1
        %s426 = smul.addr %s425, 8
        %s427 = scalar_lea.vmem [#allocation15], %s426
        %p428 = scmp.eq.s32.totalorder %s36, 0
        // Predicated region
        $region73: #{tpu_custom_call.1} parent=51 // pred_check
          %p429 = pneg %p428
        $region74: #{tpu_custom_call.1} parent=51 // pred_check_branch
          %431 = sbr.rel (%p429) target = $region76
        $region75: #{tpu_custom_call.1} parent=51 // pred_region
          %v432 = vld [vmem:[%s369] sm:$0xff]
          %v433 = vld [vmem:[#allocation11] sm:$0xff]
          %v434 = vld [vmem:[#allocation11 + $0x8] sm:$0xff]
          %v435 = vld [vmem:[#allocation11 + $0x10] sm:$0xff]
          %v436 = vld [vmem:[#allocation11 + $0x18] sm:$0xff]
          %v437 = vld [vmem:[%s3] sm:$0x1]
          %v439 = vlaneseq
          %v440 = vshrl.u32 %v439, 7
          %v441 = vsub.s32 0, %v440
          %v442 = vrot.slane %v437, %v441
          %vm444 = vcmask 261120
          %v446 = vsel %vm444, %v432, 0
          %448 = vmatprep.subr.mxu0 0.0
          %449 = vmatpush1.msra.mxu0 %v433
          %450 = vmatprep.subr.mxu0 0.0
          %451 = vmatpush1.msra.mxu0 %v434
          %452 = vmatprep.subr.mxu0 0.0
          %453 = vmatpush1.msra.mxu0 %v435
          %454 = vmatprep.subr.mxu0 0.0
          %455 = vmatpush1.msra.mxu0 %v436
          %456 = vmatprep.subr.mxu0 0.0
          %457 = vmatpush1.msra.mxu0 0.0
          %458 = vmatprep.subr.mxu0 0.0
          %459 = vmatpush1.msra.mxu0 0.0
          %460 = vmatprep.subr.mxu0 0.0
          %461 = vmatpush1.msra.mxu0 0.0
          %462 = vmatprep.subr.mxu0 0.0
          %463 = vmatpush1.msra.mxu0 0.0
          %464 = vmatprep.subr.mxu0 0.0
          %465 = vmatpush1.msra.mxu0 0.0
          %466 = vmatprep.subr.mxu0 0.0
          %467 = vmatpush1.msra.mxu0 0.0
          %468 = vmatprep.subr.mxu0 0.0
          %469 = vmatpush1.msra.mxu0 0.0
          %470 = vmatprep.subr.mxu0 0.0
          %471 = vmatpush1.msra.mxu0 0.0
          %472 = vmatprep.subr.mxu0 0.0
          %473 = vmatpush1.msra.mxu0 0.0
          %474 = vmatprep.subr.mxu0 0.0
          %475 = vmatpush1.msra.mxu0 0.0
          %476 = vmatprep.subr.mxu0 0.0
          %477 = vmatpush1.msra.mxu0 0.0
          %478 = vmatprep.subr.mxu0 0.0
          %479 = vmatpush1.msra.mxu0 0.0
          %480 = vmatprep.subr.mxu0 0.0
          %481 = vmatpush1.msra.mxu0 0.0
          %482 = vmatprep.subr.mxu0 0.0
          %483 = vmatpush1.msra.mxu0 0.0
          %484 = vmatprep.subr.mxu0 0.0
          %485 = vmatpush1.msra.mxu0 0.0
          %486 = vmatprep.subr.mxu0 0.0
          %487 = vmatpush1.msra.mxu0 0.0
          %488 = vmatprep.subr.mxu0 0.0
          %489 = vmatpush1.msra.mxu0 0.0
          %490 = vmatprep.subr.mxu0 0.0
          %491 = vmatpush1.msra.mxu0 0.0
          %492 = vmatprep.subr.mxu0 0.0
          %493 = vmatpush1.msra.mxu0 0.0
          %494 = vmatprep.subr.mxu0 0.0
          %495 = vmatpush1.msra.mxu0 0.0
          %496 = vmatprep.subr.mxu0 0.0
          %497 = vmatpush1.msra.mxu0 0.0
          %498 = vmatprep.subr.mxu0 0.0
          %499 = vmatpush1.msra.mxu0 0.0
          %500 = vmatprep.subr.mxu0 0.0
          %501 = vmatpush1.msra.mxu0 0.0
          %502 = vmatprep.subr.mxu0 0.0
          %503 = vmatpush1.msra.mxu0 0.0
          %504 = vmatprep.subr.mxu0 0.0
          %505 = vmatpush1.msra.mxu0 0.0
          %506 = vmatprep.subr.mxu0 0.0
          %507 = vmatpush1.msra.mxu0 0.0
          %508 = vmatprep.subr.mxu0 0.0
          %509 = vmatpush1.msra.mxu0 0.0
          %510 = vmatprep.subr.mxu0 0.0
          %511 = vmatpush1.msra.mxu0 0.0
          %512 = vmatprep.mubr.f32.mxu0 0.0
          %513 = vmatmul.mubr.f32.gmra.mrb[0].mxu0 %v446
          %v514 = vpop.f32.mrb[0].mxu0
          %v515 = vadd.f32 %v442, %v514
          %v516 = vpop.f32.mrb[0].mxu0
          %517 = vdwg.mxu0
          %v518 = vmul.f32 %v515, 0.35355338
          %520 = vrot.lane.b32.xlu0 %v518, 120
          %v521 = vpop.permute.xlu0 %520
          %523 = vrot.lane.b32.xlu0 %v518, 112
          %v524 = vpop.permute.xlu0 %523
          %526 = vrot.lane.b32.xlu0 %v518, 104
          %v527 = vpop.permute.xlu0 %526
          %v529 = vcombine.low %v518, %v524
          %v530 = vcombine.high %v518, %v524
          %v532 = vunpack.c.l.s4 1983009808
          %v533 = vunpack.c.0.s8 %v532
          %v534 = vlaneseq
          %v535 = vshrl.u32 %v534, 7
          %v536 = vsub.s32 %v533, %v535
          %v537 = vrot.slane %v529, %v536
          %v539 = vunpack.c.l.s4 1983009808
          %v540 = vunpack.c.0.s8 %v539
          %v541 = vlaneseq
          %v542 = vshrl.u32 %v541, 7
          %v543 = vsub.s32 %v540, %v542
          %v544 = vrot.slane %v530, %v543
          %v545 = vcombine.low %v521, %v527
          %v546 = vcombine.high %v521, %v527
          %v548 = vunpack.c.l.s4 1983009808
          %v549 = vunpack.c.0.s8 %v548
          %v550 = vlaneseq
          %v551 = vshrl.u32 %v550, 7
          %v552 = vsub.s32 %v549, %v551
          %v553 = vrot.slane %v545, %v552
          %v555 = vunpack.c.l.s4 1983009808
          %v556 = vunpack.c.0.s8 %v555
          %v557 = vlaneseq
          %v558 = vshrl.u32 %v557, 7
          %v559 = vsub.s32 %v556, %v558
          %v560 = vrot.slane %v546, %v559
          %v561 = vcombine.low %v537, %v553
          %v562 = vcombine.high %v537, %v553
          %v564 = vunpack.c.l.s4 1934713408
          %v565 = vunpack.c.0.s8 %v564
          %v566 = vlaneseq
          %v567 = vshrl.u32 %v566, 7
          %v568 = vsub.s32 %v565, %v567
          %v569 = vrot.slane %v561, %v568
          %v571 = vunpack.c.l.s4 1934713408
          %v572 = vunpack.c.0.s8 %v571
          %v573 = vlaneseq
          %v574 = vshrl.u32 %v573, 7
          %v575 = vsub.s32 %v572, %v574
          %v576 = vrot.slane %v562, %v575
          %v577 = vcombine.low %v544, %v560
          %v578 = vcombine.high %v544, %v560
          %v580 = vunpack.c.l.s4 1934713408
          %v581 = vunpack.c.0.s8 %v580
          %v582 = vlaneseq
          %v583 = vshrl.u32 %v582, 7
          %v584 = vsub.s32 %v581, %v583
          %v585 = vrot.slane %v577, %v584
          %v587 = vunpack.c.l.s4 1934713408
          %v588 = vunpack.c.0.s8 %v587
          %v589 = vlaneseq
          %v590 = vshrl.u32 %v589, 7
          %v591 = vsub.s32 %v588, %v590
          %v592 = vrot.slane %v578, %v591
          %v593 = vcombine.high %v569, 0.0
          %v594 = vcombine.high %v576, 0.0
          %v595 = vcombine.high %v585, 0.0
          %v596 = vcombine.high %v592, 0.0
          %v597 = vcombine.low %v569, %v576
          %v599 = vunpack.c.l.s4 1983009808
          %v600 = vunpack.c.0.s8 %v599
          %v601 = vlaneseq
          %v602 = vshrl.u32 %v601, 7
          %v603 = vsub.s32 %v600, %v602
          %v604 = vrot.slane %v597, %v603
          %v605 = vcombine.low %v593, %v594
          %v607 = vunpack.c.l.s4 1983009808
          %v608 = vunpack.c.0.s8 %v607
          %v609 = vlaneseq
          %v610 = vshrl.u32 %v609, 7
          %v611 = vsub.s32 %v608, %v610
          %v612 = vrot.slane %v605, %v611
          %v613 = vcombine.low %v585, %v592
          %v615 = vunpack.c.l.s4 1983009808
          %v616 = vunpack.c.0.s8 %v615
          %v617 = vlaneseq
          %v618 = vshrl.u32 %v617, 7
          %v619 = vsub.s32 %v616, %v618
          %v620 = vrot.slane %v613, %v619
          %v621 = vcombine.low %v595, %v596
          %v623 = vunpack.c.l.s4 1983009808
          %v624 = vunpack.c.0.s8 %v623
          %v625 = vlaneseq
          %v626 = vshrl.u32 %v625, 7
          %v627 = vsub.s32 %v624, %v626
          %v628 = vrot.slane %v621, %v627
          %v629 = vcombine.low %v604, %v612
          %v630 = vcombine.high %v604, %v612
          %v632 = vunpack.c.l.s4 1934713408
          %v633 = vunpack.c.0.s8 %v632
          %v634 = vlaneseq
          %v635 = vshrl.u32 %v634, 7
          %v636 = vsub.s32 %v633, %v635
          %v637 = vrot.slane %v629, %v636
          %v639 = vunpack.c.l.s4 1934713408
          %v640 = vunpack.c.0.s8 %v639
          %v641 = vlaneseq
          %v642 = vshrl.u32 %v641, 7
          %v643 = vsub.s32 %v640, %v642
          %v644 = vrot.slane %v630, %v643
          %v645 = vcombine.low %v620, %v628
          %v646 = vcombine.high %v620, %v628
          %v648 = vunpack.c.l.s4 1934713408
          %v649 = vunpack.c.0.s8 %v648
          %v650 = vlaneseq
          %v651 = vshrl.u32 %v650, 7
          %v652 = vsub.s32 %v649, %v651
          %v653 = vrot.slane %v645, %v652
          %v655 = vunpack.c.l.s4 1934713408
          %v656 = vunpack.c.0.s8 %v655
          %v657 = vlaneseq
          %v658 = vshrl.u32 %v657, 7
          %v659 = vsub.s32 %v656, %v658
          %v660 = vrot.slane %v646, %v659
          %v661 = vcombine.low %v637, %v653
          %v662 = vcombine.high %v637, %v653
          %v663 = vcombine.low %v644, %v660
          %v664 = vcombine.high %v644, %v660
          %vm665 = vcmask 64512
          %666 = vst.msk [vmem:[#allocation2] sm:$0xff] %vm665, %v661
          %667 = vst.msk [vmem:[#allocation2 + $0x8] sm:$0xff] %vm665, %v662
          %668 = vst.msk [vmem:[#allocation2 + $0x10] sm:$0xff] %vm665, %v663
          %669 = vst.msk [vmem:[#allocation2 + $0x18] sm:$0xff] %vm665, %v664
          %vm670 = vcmask 7168
          %671 = vst.msk [vmem:[#allocation3] sm:$0xff] %vm670, -inf
          %672 = vst.msk [vmem:[#allocation3 + $0x8] sm:$0xff] %vm670, -inf
          %673 = vst.msk [vmem:[#allocation3 + $0x10] sm:$0xff] %vm670, -inf
          %674 = vst.msk [vmem:[#allocation3 + $0x18] sm:$0xff] %vm670, -inf
          %675 = vst.msk [vmem:[#allocation4] sm:$0xff] %vm670, 0.0
          %676 = vst.msk [vmem:[#allocation4 + $0x8] sm:$0xff] %vm670, 0.0
          %677 = vst.msk [vmem:[#allocation4 + $0x10] sm:$0xff] %vm670, 0.0
          %678 = vst.msk [vmem:[#allocation4 + $0x18] sm:$0xff] %vm670, 0.0
          %679 = vst.msk [vmem:[#allocation5] sm:$0xff] %vm665, 0.0
          %680 = vst.msk [vmem:[#allocation5 + $0x8] sm:$0xff] %vm665, 0.0
          %681 = vst.msk [vmem:[#allocation5 + $0x10] sm:$0xff] %vm665, 0.0
          %682 = vst.msk [vmem:[#allocation5 + $0x18] sm:$0xff] %vm665, 0.0
        $region76: #{tpu_custom_call.1} parent=51 // pred_fallthru
          _
        %v683 = vld [vmem:[%s378] sm:$0xff]
        %v684 = vld [vmem:[#allocation12] sm:$0xff]
        %v685 = vld [vmem:[#allocation12 + $0x8] sm:$0xff]
        %v686 = vld [vmem:[#allocation12 + $0x10] sm:$0xff]
        %v687 = vld [vmem:[#allocation12 + $0x18] sm:$0xff]
        %v688 = vld [vmem:[%s5] sm:$0x1]
        %v690 = vlaneseq
        %v691 = vshrl.u32 %v690, 7
        %v692 = vsub.s32 0, %v691
        %v693 = vrot.slane %v688, %v692
        %vm695 = vcmask 261120
        %v697 = vsel %vm695, %v683, 0
        %699 = vmatprep.subr.mxu0 0.0
        %700 = vmatpush1.msra.mxu0 %v684
        %701 = vmatprep.subr.mxu0 0.0
        %702 = vmatpush1.msra.mxu0 %v685
        %703 = vmatprep.subr.mxu0 0.0
        %704 = vmatpush1.msra.mxu0 %v686
        %705 = vmatprep.subr.mxu0 0.0
        %706 = vmatpush1.msra.mxu0 %v687
        %707 = vmatprep.subr.mxu0 0.0
        %708 = vmatpush1.msra.mxu0 0.0
        %709 = vmatprep.subr.mxu0 0.0
        %710 = vmatpush1.msra.mxu0 0.0
        %711 = vmatprep.subr.mxu0 0.0
        %712 = vmatpush1.msra.mxu0 0.0
        %713 = vmatprep.subr.mxu0 0.0
        %714 = vmatpush1.msra.mxu0 0.0
        %715 = vmatprep.subr.mxu0 0.0
        %716 = vmatpush1.msra.mxu0 0.0
        %717 = vmatprep.subr.mxu0 0.0
        %718 = vmatpush1.msra.mxu0 0.0
        %719 = vmatprep.subr.mxu0 0.0
        %720 = vmatpush1.msra.mxu0 0.0
        %721 = vmatprep.subr.mxu0 0.0
        %722 = vmatpush1.msra.mxu0 0.0
        %723 = vmatprep.subr.mxu0 0.0
        %724 = vmatpush1.msra.mxu0 0.0
        %725 = vmatprep.subr.mxu0 0.0
        %726 = vmatpush1.msra.mxu0 0.0
        %727 = vmatprep.subr.mxu0 0.0
        %728 = vmatpush1.msra.mxu0 0.0
        %729 = vmatprep.subr.mxu0 0.0
        %730 = vmatpush1.msra.mxu0 0.0
        %731 = vmatprep.subr.mxu0 0.0
        %732 = vmatpush1.msra.mxu0 0.0
        %733 = vmatprep.subr.mxu0 0.0
        %734 = vmatpush1.msra.mxu0 0.0
        %735 = vmatprep.subr.mxu0 0.0
        %736 = vmatpush1.msra.mxu0 0.0
        %737 = vmatprep.subr.mxu0 0.0
        %738 = vmatpush1.msra.mxu0 0.0
        %739 = vmatprep.subr.mxu0 0.0
        %740 = vmatpush1.msra.mxu0 0.0
        %741 = vmatprep.subr.mxu0 0.0
        %742 = vmatpush1.msra.mxu0 0.0
        %743 = vmatprep.subr.mxu0 0.0
        %744 = vmatpush1.msra.mxu0 0.0
        %745 = vmatprep.subr.mxu0 0.0
        %746 = vmatpush1.msra.mxu0 0.0
        %747 = vmatprep.subr.mxu0 0.0
        %748 = vmatpush1.msra.mxu0 0.0
        %749 = vmatprep.subr.mxu0 0.0
        %750 = vmatpush1.msra.mxu0 0.0
        %751 = vmatprep.subr.mxu0 0.0
        %752 = vmatpush1.msra.mxu0 0.0
        %753 = vmatprep.subr.mxu0 0.0
        %754 = vmatpush1.msra.mxu0 0.0
        %755 = vmatprep.subr.mxu0 0.0
        %756 = vmatpush1.msra.mxu0 0.0
        %757 = vmatprep.subr.mxu0 0.0
        %758 = vmatpush1.msra.mxu0 0.0
        %759 = vmatprep.subr.mxu0 0.0
        %760 = vmatpush1.msra.mxu0 0.0
        %761 = vmatprep.subr.mxu0 0.0
        %762 = vmatpush1.msra.mxu0 0.0
        %763 = vmatprep.mubr.f32.mxu0 0.0
        %764 = vmatmul.mubr.f32.gmra.mrb[0].mxu0 %v697
        %v765 = vpop.f32.mrb[0].mxu0
        %v766 = vadd.f32 %v693, %v765
        %v767 = vpop.f32.mrb[0].mxu0
        %768 = vdwg.mxu0
        %770 = vrot.lane.b32.xlu0 %v766, 120
        %v771 = vpop.permute.xlu0 %770
        %773 = vrot.lane.b32.xlu0 %v766, 112
        %v774 = vpop.permute.xlu0 %773
        %776 = vrot.lane.b32.xlu0 %v766, 104
        %v777 = vpop.permute.xlu0 %776
        %v779 = vcombine.low %v766, %v774
        %v780 = vcombine.high %v766, %v774
        %v782 = vunpack.c.l.s4 1983009808
        %v783 = vunpack.c.0.s8 %v782
        %v784 = vlaneseq
        %v785 = vshrl.u32 %v784, 7
        %v786 = vsub.s32 %v783, %v785
        %v787 = vrot.slane %v779, %v786
        %v789 = vunpack.c.l.s4 1983009808
        %v790 = vunpack.c.0.s8 %v789
        %v791 = vlaneseq
        %v792 = vshrl.u32 %v791, 7
        %v793 = vsub.s32 %v790, %v792
        %v794 = vrot.slane %v780, %v793
        %v795 = vcombine.low %v771, %v777
        %v796 = vcombine.high %v771, %v777
        %v798 = vunpack.c.l.s4 1983009808
        %v799 = vunpack.c.0.s8 %v798
        %v800 = vlaneseq
        %v801 = vshrl.u32 %v800, 7
        %v802 = vsub.s32 %v799, %v801
        %v803 = vrot.slane %v795, %v802
        %v805 = vunpack.c.l.s4 1983009808
        %v806 = vunpack.c.0.s8 %v805
        %v807 = vlaneseq
        %v808 = vshrl.u32 %v807, 7
        %v809 = vsub.s32 %v806, %v808
        %v810 = vrot.slane %v796, %v809
        %v811 = vcombine.low %v787, %v803
        %v812 = vcombine.high %v787, %v803
        %v814 = vunpack.c.l.s4 1934713408
        %v815 = vunpack.c.0.s8 %v814
        %v816 = vlaneseq
        %v817 = vshrl.u32 %v816, 7
        %v818 = vsub.s32 %v815, %v817
        %v819 = vrot.slane %v811, %v818
        %v821 = vunpack.c.l.s4 1934713408
        %v822 = vunpack.c.0.s8 %v821
        %v823 = vlaneseq
        %v824 = vshrl.u32 %v823, 7
        %v825 = vsub.s32 %v822, %v824
        %v826 = vrot.slane %v812, %v825
        %v827 = vcombine.low %v794, %v810
        %v828 = vcombine.high %v794, %v810
        %v830 = vunpack.c.l.s4 1934713408
        %v831 = vunpack.c.0.s8 %v830
        %v832 = vlaneseq
        %v833 = vshrl.u32 %v832, 7
        %v834 = vsub.s32 %v831, %v833
        %v835 = vrot.slane %v827, %v834
        %v837 = vunpack.c.l.s4 1934713408
        %v838 = vunpack.c.0.s8 %v837
        %v839 = vlaneseq
        %v840 = vshrl.u32 %v839, 7
        %v841 = vsub.s32 %v838, %v840
        %v842 = vrot.slane %v828, %v841
        %v843 = vcombine.high %v819, 0.0
        %v844 = vcombine.high %v826, 0.0
        %v845 = vcombine.high %v835, 0.0
        %v846 = vcombine.high %v842, 0.0
        %v847 = vcombine.low %v819, %v826
        %v849 = vunpack.c.l.s4 1983009808
        %v850 = vunpack.c.0.s8 %v849
        %v851 = vlaneseq
        %v852 = vshrl.u32 %v851, 7
        %v853 = vsub.s32 %v850, %v852
        %v854 = vrot.slane %v847, %v853
        %v855 = vcombine.low %v843, %v844
        %v857 = vunpack.c.l.s4 1983009808
        %v858 = vunpack.c.0.s8 %v857
        %v859 = vlaneseq
        %v860 = vshrl.u32 %v859, 7
        %v861 = vsub.s32 %v858, %v860
        %v862 = vrot.slane %v855, %v861
        %v863 = vcombine.low %v835, %v842
        %v865 = vunpack.c.l.s4 1983009808
        %v866 = vunpack.c.0.s8 %v865
        %v867 = vlaneseq
        %v868 = vshrl.u32 %v867, 7
        %v869 = vsub.s32 %v866, %v868
        %v870 = vrot.slane %v863, %v869
        %v871 = vcombine.low %v845, %v846
        %v873 = vunpack.c.l.s4 1983009808
        %v874 = vunpack.c.0.s8 %v873
        %v875 = vlaneseq
        %v876 = vshrl.u32 %v875, 7
        %v877 = vsub.s32 %v874, %v876
        %v878 = vrot.slane %v871, %v877
        %v879 = vcombine.low %v854, %v862
        %v880 = vcombine.high %v854, %v862
        %v882 = vunpack.c.l.s4 1934713408
        %v883 = vunpack.c.0.s8 %v882
        %v884 = vlaneseq
        %v885 = vshrl.u32 %v884, 7
        %v886 = vsub.s32 %v883, %v885
        %v887 = vrot.slane %v879, %v886
        %v889 = vunpack.c.l.s4 1934713408
        %v890 = vunpack.c.0.s8 %v889
        %v891 = vlaneseq
        %v892 = vshrl.u32 %v891, 7
        %v893 = vsub.s32 %v890, %v892
        %v894 = vrot.slane %v880, %v893
        %v895 = vcombine.low %v870, %v878
        %v896 = vcombine.high %v870, %v878
        %v898 = vunpack.c.l.s4 1934713408
        %v899 = vunpack.c.0.s8 %v898
        %v900 = vlaneseq
        %v901 = vshrl.u32 %v900, 7
        %v902 = vsub.s32 %v899, %v901
        %v903 = vrot.slane %v895, %v902
        %v905 = vunpack.c.l.s4 1934713408
        %v906 = vunpack.c.0.s8 %v905
        %v907 = vlaneseq
        %v908 = vshrl.u32 %v907, 7
        %v909 = vsub.s32 %v906, %v908
        %v910 = vrot.slane %v896, %v909
        %v911 = vcombine.low %v887, %v903
        %v912 = vcombine.high %v887, %v903
        %v913 = vcombine.low %v894, %v910
        %v914 = vcombine.high %v894, %v910
        %915 = vrot.lane.b32.xlu0 %v766, 96
        %v916 = vpop.permute.xlu0 %915
        %917 = vrot.lane.b32.xlu0 %v771, 96
        %v918 = vpop.permute.xlu0 %917
        %919 = vrot.lane.b32.xlu0 %v774, 96
        %v920 = vpop.permute.xlu0 %919
        %921 = vrot.lane.b32.xlu0 %v777, 96
        %v922 = vpop.permute.xlu0 %921
        %v927 = vcombine.low %v916, %v920
        %v928 = vcombine.high %v916, %v920
        %v930 = vunpack.c.l.s4 1983009808
        %v931 = vunpack.c.0.s8 %v930
        %v932 = vlaneseq
        %v933 = vshrl.u32 %v932, 7
        %v934 = vsub.s32 %v931, %v933
        %v935 = vrot.slane %v927, %v934
        %v937 = vunpack.c.l.s4 1983009808
        %v938 = vunpack.c.0.s8 %v937
        %v939 = vlaneseq
        %v940 = vshrl.u32 %v939, 7
        %v941 = vsub.s32 %v938, %v940
        %v942 = vrot.slane %v928, %v941
        %v943 = vcombine.low %v918, %v922
        %v944 = vcombine.high %v918, %v922
        %v946 = vunpack.c.l.s4 1983009808
        %v947 = vunpack.c.0.s8 %v946
        %v948 = vlaneseq
        %v949 = vshrl.u32 %v948, 7
        %v950 = vsub.s32 %v947, %v949
        %v951 = vrot.slane %v943, %v950
        %v953 = vunpack.c.l.s4 1983009808
        %v954 = vunpack.c.0.s8 %v953
        %v955 = vlaneseq
        %v956 = vshrl.u32 %v955, 7
        %v957 = vsub.s32 %v954, %v956
        %v958 = vrot.slane %v944, %v957
        %v959 = vcombine.low %v935, %v951
        %v960 = vcombine.high %v935, %v951
        %v962 = vunpack.c.l.s4 1934713408
        %v963 = vunpack.c.0.s8 %v962
        %v964 = vlaneseq
        %v965 = vshrl.u32 %v964, 7
        %v966 = vsub.s32 %v963, %v965
        %v967 = vrot.slane %v959, %v966
        %v969 = vunpack.c.l.s4 1934713408
        %v970 = vunpack.c.0.s8 %v969
        %v971 = vlaneseq
        %v972 = vshrl.u32 %v971, 7
        %v973 = vsub.s32 %v970, %v972
        %v974 = vrot.slane %v960, %v973
        %v975 = vcombine.low %v942, %v958
        %v976 = vcombine.high %v942, %v958
        %v978 = vunpack.c.l.s4 1934713408
        %v979 = vunpack.c.0.s8 %v978
        %v980 = vlaneseq
        %v981 = vshrl.u32 %v980, 7
        %v982 = vsub.s32 %v979, %v981
        %v983 = vrot.slane %v975, %v982
        %v985 = vunpack.c.l.s4 1934713408
        %v986 = vunpack.c.0.s8 %v985
        %v987 = vlaneseq
        %v988 = vshrl.u32 %v987, 7
        %v989 = vsub.s32 %v986, %v988
        %v990 = vrot.slane %v976, %v989
        %v991 = vcombine.high %v967, 0.0
        %v992 = vcombine.high %v974, 0.0
        %v993 = vcombine.high %v983, 0.0
        %v994 = vcombine.high %v990, 0.0
        %v995 = vcombine.low %v967, %v974
        %v997 = vunpack.c.l.s4 1983009808
        %v998 = vunpack.c.0.s8 %v997
        %v999 = vlaneseq
        %v1000 = vshrl.u32 %v999, 7
        %v1001 = vsub.s32 %v998, %v1000
        %v1002 = vrot.slane %v995, %v1001
        %v1003 = vcombine.low %v991, %v992
        %v1005 = vunpack.c.l.s4 1983009808
        %v1006 = vunpack.c.0.s8 %v1005
        %v1007 = vlaneseq
        %v1008 = vshrl.u32 %v1007, 7
        %v1009 = vsub.s32 %v1006, %v1008
        %v1010 = vrot.slane %v1003, %v1009
        %v1011 = vcombine.low %v983, %v990
        %v1013 = vunpack.c.l.s4 1983009808
        %v1014 = vunpack.c.0.s8 %v1013
        %v1015 = vlaneseq
        %v1016 = vshrl.u32 %v1015, 7
        %v1017 = vsub.s32 %v1014, %v1016
        %v1018 = vrot.slane %v1011, %v1017
        %v1019 = vcombine.low %v993, %v994
        %v1021 = vunpack.c.l.s4 1983009808
        %v1022 = vunpack.c.0.s8 %v1021
        %v1023 = vlaneseq
        %v1024 = vshrl.u32 %v1023, 7
        %v1025 = vsub.s32 %v1022, %v1024
        %v1026 = vrot.slane %v1019, %v1025
        %v1027 = vcombine.low %v1002, %v1010
        %v1028 = vcombine.high %v1002, %v1010
        %v1030 = vunpack.c.l.s4 1934713408
        %v1031 = vunpack.c.0.s8 %v1030
        %v1032 = vlaneseq
        %v1033 = vshrl.u32 %v1032, 7
        %v1034 = vsub.s32 %v1031, %v1033
        %v1035 = vrot.slane %v1027, %v1034
        %v1037 = vunpack.c.l.s4 1934713408
        %v1038 = vunpack.c.0.s8 %v1037
        %v1039 = vlaneseq
        %v1040 = vshrl.u32 %v1039, 7
        %v1041 = vsub.s32 %v1038, %v1040
        %v1042 = vrot.slane %v1028, %v1041
        %v1043 = vcombine.low %v1018, %v1026
        %v1044 = vcombine.high %v1018, %v1026
        %v1046 = vunpack.c.l.s4 1934713408
        %v1047 = vunpack.c.0.s8 %v1046
        %v1048 = vlaneseq
        %v1049 = vshrl.u32 %v1048, 7
        %v1050 = vsub.s32 %v1047, %v1049
        %v1051 = vrot.slane %v1043, %v1050
        %v1053 = vunpack.c.l.s4 1934713408
        %v1054 = vunpack.c.0.s8 %v1053
        %v1055 = vlaneseq
        %v1056 = vshrl.u32 %v1055, 7
        %v1057 = vsub.s32 %v1054, %v1056
        %v1058 = vrot.slane %v1044, %v1057
        %v1059 = vcombine.low %v1035, %v1051
        %v1060 = vcombine.high %v1035, %v1051
        %v1061 = vcombine.low %v1042, %v1058
        %v1062 = vcombine.high %v1042, %v1058
        %v1063 = vld [vmem:[#allocation2] sm:$0xff]
        %v1064 = vld [vmem:[#allocation2 + $0x8] sm:$0xff]
        %v1065 = vld [vmem:[#allocation2 + $0x10] sm:$0xff]
        %v1066 = vld [vmem:[#allocation2 + $0x18] sm:$0xff]
        %vm1067 = vcmask 64512
        %v1069 = vsel %vm1067, %v1063, 0
        %v1072 = vsel %vm1067, %v911, 0
        %1074 = vmatprep.subr.mxu0 0.0
        %1075 = vmatpush1.xpose.msra.mxu0 %v1072
        %1076 = vmatprep.subr.mxu0 0.0
        %1077 = vmatpush1.xpose.msra.mxu0 0.0
        %1078 = vmatprep.subr.mxu0 0.0
        %1079 = vmatpush1.xpose.msra.mxu0 0.0
        %1080 = vmatprep.subr.mxu0 0.0
        %1081 = vmatpush1.xpose.msra.mxu0 0.0
        %1082 = vmatprep.subr.mxu0 0.0
        %1083 = vmatpush1.xpose.msra.mxu0 0.0
        %1084 = vmatprep.subr.mxu0 0.0
        %1085 = vmatpush1.xpose.msra.mxu0 0.0
        %1086 = vmatprep.subr.mxu0 0.0
        %1087 = vmatpush1.xpose.msra.mxu0 0.0
        %1088 = vmatprep.subr.mxu0 0.0
        %1089 = vmatpush1.xpose.msra.mxu0 0.0
        %1090 = vmatprep.subr.mxu0 0.0
        %1091 = vmatpush1.xpose.msra.mxu0 0.0
        %1092 = vmatprep.subr.mxu0 0.0
        %1093 = vmatpush1.xpose.msra.mxu0 0.0
        %1094 = vmatprep.subr.mxu0 0.0
        %1095 = vmatpush1.xpose.msra.mxu0 0.0
        %1096 = vmatprep.subr.mxu0 0.0
        %1097 = vmatpush1.xpose.msra.mxu0 0.0
        %1098 = vmatprep.subr.mxu0 0.0
        %1099 = vmatpush1.xpose.msra.mxu0 0.0
        %1100 = vmatprep.subr.mxu0 0.0
        %1101 = vmatpush1.xpose.msra.mxu0 0.0
        %1102 = vmatprep.subr.mxu0 0.0
        %1103 = vmatpush1.xpose.msra.mxu0 0.0
        %1104 = vmatprep.subr.mxu0 0.0
        %1105 = vmatpush1.xpose.msra.mxu0 0.0
        %1106 = vmatprep.subr.mxu0 0.0
        %1107 = vmatpush1.xpose.msra.mxu0 0.0
        %1108 = vmatprep.subr.mxu0 0.0
        %1109 = vmatpush1.xpose.msra.mxu0 0.0
        %1110 = vmatprep.subr.mxu0 0.0
        %1111 = vmatpush1.xpose.msra.mxu0 0.0
        %1112 = vmatprep.subr.mxu0 0.0
        %1113 = vmatpush1.xpose.msra.mxu0 0.0
        %1114 = vmatprep.subr.mxu0 0.0
        %1115 = vmatpush1.xpose.msra.mxu0 0.0
        %1116 = vmatprep.subr.mxu0 0.0
        %1117 = vmatpush1.xpose.msra.mxu0 0.0
        %1118 = vmatprep.subr.mxu0 0.0
        %1119 = vmatpush1.xpose.msra.mxu0 0.0
        %1120 = vmatprep.subr.mxu0 0.0
        %1121 = vmatpush1.xpose.msra.mxu0 0.0
        %1122 = vmatprep.subr.mxu0 0.0
        %1123 = vmatpush1.xpose.msra.mxu0 0.0
        %1124 = vmatprep.subr.mxu0 0.0
        %1125 = vmatpush1.xpose.msra.mxu0 0.0
        %1126 = vmatprep.subr.mxu0 0.0
        %1127 = vmatpush1.xpose.msra.mxu0 0.0
        %1128 = vmatprep.subr.mxu0 0.0
        %1129 = vmatpush1.xpose.msra.mxu0 0.0
        %1130 = vmatprep.subr.mxu0 0.0
        %1131 = vmatpush1.xpose.msra.mxu0 0.0
        %1132 = vmatprep.subr.mxu0 0.0
        %1133 = vmatpush1.xpose.msra.mxu0 0.0
        %1134 = vmatprep.subr.mxu0 0.0
        %1135 = vmatpush1.xpose.msra.mxu0 0.0
        %1136 = vmatprep.subr.mxu0 0.0
        %1137 = vmatpush1.xpose.msra.mxu0 0.0
        %1138 = vmatprep.mubr.f32.mxu0 0.0
        %1139 = vmatmul.mubr.f32.gmra.mrb[0].mxu0 %v1069
        %v1140 = vpop.f32.mrb[0].mxu0
        %v1141 = vadd.f32 0.0, %v1140
        %v1142 = vpop.f32.mrb[0].mxu0
        %1143 = vdwg.mxu0
        %v1145 = vsel %vm1067, %v1064, 0
        %v1148 = vsel %vm1067, %v912, 0
        %1150 = vmatprep.subr.mxu0 0.0
        %1151 = vmatpush1.xpose.msra.mxu0 %v1148
        %1152 = vmatprep.subr.mxu0 0.0
        %1153 = vmatpush1.xpose.msra.mxu0 0.0
        %1154 = vmatprep.subr.mxu0 0.0
        %1155 = vmatpush1.xpose.msra.mxu0 0.0
        %1156 = vmatprep.subr.mxu0 0.0
        %1157 = vmatpush1.xpose.msra.mxu0 0.0
        %1158 = vmatprep.subr.mxu0 0.0
        %1159 = vmatpush1.xpose.msra.mxu0 0.0
        %1160 = vmatprep.subr.mxu0 0.0
        %1161 = vmatpush1.xpose.msra.mxu0 0.0
        %1162 = vmatprep.subr.mxu0 0.0
        %1163 = vmatpush1.xpose.msra.mxu0 0.0
        %1164 = vmatprep.subr.mxu0 0.0
        %1165 = vmatpush1.xpose.msra.mxu0 0.0
        %1166 = vmatprep.subr.mxu0 0.0
        %1167 = vmatpush1.xpose.msra.mxu0 0.0
        %1168 = vmatprep.subr.mxu0 0.0
        %1169 = vmatpush1.xpose.msra.mxu0 0.0
        %1170 = vmatprep.subr.mxu0 0.0
        %1171 = vmatpush1.xpose.msra.mxu0 0.0
        %1172 = vmatprep.subr.mxu0 0.0
        %1173 = vmatpush1.xpose.msra.mxu0 0.0
        %1174 = vmatprep.subr.mxu0 0.0
        %1175 = vmatpush1.xpose.msra.mxu0 0.0
        %1176 = vmatprep.subr.mxu0 0.0
        %1177 = vmatpush1.xpose.msra.mxu0 0.0
        %1178 = vmatprep.subr.mxu0 0.0
        %1179 = vmatpush1.xpose.msra.mxu0 0.0
        %1180 = vmatprep.subr.mxu0 0.0
        %1181 = vmatpush1.xpose.msra.mxu0 0.0
        %1182 = vmatprep.subr.mxu0 0.0
        %1183 = vmatpush1.xpose.msra.mxu0 0.0
        %1184 = vmatprep.subr.mxu0 0.0
        %1185 = vmatpush1.xpose.msra.mxu0 0.0
        %1186 = vmatprep.subr.mxu0 0.0
        %1187 = vmatpush1.xpose.msra.mxu0 0.0
        %1188 = vmatprep.subr.mxu0 0.0
        %1189 = vmatpush1.xpose.msra.mxu0 0.0
        %1190 = vmatprep.subr.mxu0 0.0
        %1191 = vmatpush1.xpose.msra.mxu0 0.0
        %1192 = vmatprep.subr.mxu0 0.0
        %1193 = vmatpush1.xpose.msra.mxu0 0.0
        %1194 = vmatprep.subr.mxu0 0.0
        %1195 = vmatpush1.xpose.msra.mxu0 0.0
        %1196 = vmatprep.subr.mxu0 0.0
        %1197 = vmatpush1.xpose.msra.mxu0 0.0
        %1198 = vmatprep.subr.mxu0 0.0
        %1199 = vmatpush1.xpose.msra.mxu0 0.0
        %1200 = vmatprep.subr.mxu0 0.0
        %1201 = vmatpush1.xpose.msra.mxu0 0.0
        %1202 = vmatprep.subr.mxu0 0.0
        %1203 = vmatpush1.xpose.msra.mxu0 0.0
        %1204 = vmatprep.subr.mxu0 0.0
        %1205 = vmatpush1.xpose.msra.mxu0 0.0
        %1206 = vmatprep.subr.mxu0 0.0
        %1207 = vmatpush1.xpose.msra.mxu0 0.0
        %1208 = vmatprep.subr.mxu0 0.0
        %1209 = vmatpush1.xpose.msra.mxu0 0.0
        %1210 = vmatprep.subr.mxu0 0.0
        %1211 = vmatpush1.xpose.msra.mxu0 0.0
        %1212 = vmatprep.subr.mxu0 0.0
        %1213 = vmatpush1.xpose.msra.mxu0 0.0
        %1214 = vmatprep.mubr.f32.mxu0 0.0
        %1215 = vmatmul.mubr.f32.gmra.mrb[0].mxu0 %v1145
        %v1216 = vpop.f32.mrb[0].mxu0
        %v1217 = vadd.f32 0.0, %v1216
        %v1218 = vpop.f32.mrb[0].mxu0
        %1219 = vdwg.mxu0
        %v1221 = vsel %vm1067, %v1065, 0
        %v1224 = vsel %vm1067, %v913, 0
        %1226 = vmatprep.subr.mxu0 0.0
        %1227 = vmatpush1.xpose.msra.mxu0 %v1224
        %1228 = vmatprep.subr.mxu0 0.0
        %1229 = vmatpush1.xpose.msra.mxu0 0.0
        %1230 = vmatprep.subr.mxu0 0.0
        %1231 = vmatpush1.xpose.msra.mxu0 0.0
        %1232 = vmatprep.subr.mxu0 0.0
        %1233 = vmatpush1.xpose.msra.mxu0 0.0
        %1234 = vmatprep.subr.mxu0 0.0
        %1235 = vmatpush1.xpose.msra.mxu0 0.0
        %1236 = vmatprep.subr.mxu0 0.0
        %1237 = vmatpush1.xpose.msra.mxu0 0.0
        %1238 = vmatprep.subr.mxu0 0.0
        %1239 = vmatpush1.xpose.msra.mxu0 0.0
        %1240 = vmatprep.subr.mxu0 0.0
        %1241 = vmatpush1.xpose.msra.mxu0 0.0
        %1242 = vmatprep.subr.mxu0 0.0
        %1243 = vmatpush1.xpose.msra.mxu0 0.0
        %1244 = vmatprep.subr.mxu0 0.0
        %1245 = vmatpush1.xpose.msra.mxu0 0.0
        %1246 = vmatprep.subr.mxu0 0.0
        %1247 = vmatpush1.xpose.msra.mxu0 0.0
        %1248 = vmatprep.subr.mxu0 0.0
        %1249 = vmatpush1.xpose.msra.mxu0 0.0
        %1250 = vmatprep.subr.mxu0 0.0
        %1251 = vmatpush1.xpose.msra.mxu0 0.0
        %1252 = vmatprep.subr.mxu0 0.0
        %1253 = vmatpush1.xpose.msra.mxu0 0.0
        %1254 = vmatprep.subr.mxu0 0.0
        %1255 = vmatpush1.xpose.msra.mxu0 0.0
        %1256 = vmatprep.subr.mxu0 0.0
        %1257 = vmatpush1.xpose.msra.mxu0 0.0
        %1258 = vmatprep.subr.mxu0 0.0
        %1259 = vmatpush1.xpose.msra.mxu0 0.0
        %1260 = vmatprep.subr.mxu0 0.0
        %1261 = vmatpush1.xpose.msra.mxu0 0.0
        %1262 = vmatprep.subr.mxu0 0.0
        %1263 = vmatpush1.xpose.msra.mxu0 0.0
        %1264 = vmatprep.subr.mxu0 0.0
        %1265 = vmatpush1.xpose.msra.mxu0 0.0
        %1266 = vmatprep.subr.mxu0 0.0
        %1267 = vmatpush1.xpose.msra.mxu0 0.0
        %1268 = vmatprep.subr.mxu0 0.0
        %1269 = vmatpush1.xpose.msra.mxu0 0.0
        %1270 = vmatprep.subr.mxu0 0.0
        %1271 = vmatpush1.xpose.msra.mxu0 0.0
        %1272 = vmatprep.subr.mxu0 0.0
        %1273 = vmatpush1.xpose.msra.mxu0 0.0
        %1274 = vmatprep.subr.mxu0 0.0
        %1275 = vmatpush1.xpose.msra.mxu0 0.0
        %1276 = vmatprep.subr.mxu0 0.0
        %1277 = vmatpush1.xpose.msra.mxu0 0.0
        %1278 = vmatprep.subr.mxu0 0.0
        %1279 = vmatpush1.xpose.msra.mxu0 0.0
        %1280 = vmatprep.subr.mxu0 0.0
        %1281 = vmatpush1.xpose.msra.mxu0 0.0
        %1282 = vmatprep.subr.mxu0 0.0
        %1283 = vmatpush1.xpose.msra.mxu0 0.0
        %1284 = vmatprep.subr.mxu0 0.0
        %1285 = vmatpush1.xpose.msra.mxu0 0.0
        %1286 = vmatprep.subr.mxu0 0.0
        %1287 = vmatpush1.xpose.msra.mxu0 0.0
        %1288 = vmatprep.subr.mxu0 0.0
        %1289 = vmatpush1.xpose.msra.mxu0 0.0
        %1290 = vmatprep.mubr.f32.mxu0 0.0
        %1291 = vmatmul.mubr.f32.gmra.mrb[0].mxu0 %v1221
        %v1292 = vpop.f32.mrb[0].mxu0
        %v1293 = vadd.f32 0.0, %v1292
        %v1294 = vpop.f32.mrb[0].mxu0
        %1295 = vdwg.mxu0
        %v1297 = vsel %vm1067, %v1066, 0
        %v1300 = vsel %vm1067, %v914, 0
        %1302 = vmatprep.subr.mxu0 0.0
        %1303 = vmatpush1.xpose.msra.mxu0 %v1300
        %1304 = vmatprep.subr.mxu0 0.0
        %1305 = vmatpush1.xpose.msra.mxu0 0.0
        %1306 = vmatprep.subr.mxu0 0.0
        %1307 = vmatpush1.xpose.msra.mxu0 0.0
        %1308 = vmatprep.subr.mxu0 0.0
        %1309 = vmatpush1.xpose.msra.mxu0 0.0
        %1310 = vmatprep.subr.mxu0 0.0
        %1311 = vmatpush1.xpose.msra.mxu0 0.0
        %1312 = vmatprep.subr.mxu0 0.0
        %1313 = vmatpush1.xpose.msra.mxu0 0.0
        %1314 = vmatprep.subr.mxu0 0.0
        %1315 = vmatpush1.xpose.msra.mxu0 0.0
        %1316 = vmatprep.subr.mxu0 0.0
        %1317 = vmatpush1.xpose.msra.mxu0 0.0
        %1318 = vmatprep.subr.mxu0 0.0
        %1319 = vmatpush1.xpose.msra.mxu0 0.0
        %1320 = vmatprep.subr.mxu0 0.0
        %1321 = vmatpush1.xpose.msra.mxu0 0.0
        %1322 = vmatprep.subr.mxu0 0.0
        %1323 = vmatpush1.xpose.msra.mxu0 0.0
        %1324 = vmatprep.subr.mxu0 0.0
        %1325 = vmatpush1.xpose.msra.mxu0 0.0
        %1326 = vmatprep.subr.mxu0 0.0
        %1327 = vmatpush1.xpose.msra.mxu0 0.0
        %1328 = vmatprep.subr.mxu0 0.0
        %1329 = vmatpush1.xpose.msra.mxu0 0.0
        %1330 = vmatprep.subr.mxu0 0.0
        %1331 = vmatpush1.xpose.msra.mxu0 0.0
        %1332 = vmatprep.subr.mxu0 0.0
        %1333 = vmatpush1.xpose.msra.mxu0 0.0
        %1334 = vmatprep.subr.mxu0 0.0
        %1335 = vmatpush1.xpose.msra.mxu0 0.0
        %1336 = vmatprep.subr.mxu0 0.0
        %1337 = vmatpush1.xpose.msra.mxu0 0.0
        %1338 = vmatprep.subr.mxu0 0.0
        %1339 = vmatpush1.xpose.msra.mxu0 0.0
        %1340 = vmatprep.subr.mxu0 0.0
        %1341 = vmatpush1.xpose.msra.mxu0 0.0
        %1342 = vmatprep.subr.mxu0 0.0
        %1343 = vmatpush1.xpose.msra.mxu0 0.0
        %1344 = vmatprep.subr.mxu0 0.0
        %1345 = vmatpush1.xpose.msra.mxu0 0.0
        %1346 = vmatprep.subr.mxu0 0.0
        %1347 = vmatpush1.xpose.msra.mxu0 0.0
        %1348 = vmatprep.subr.mxu0 0.0
        %1349 = vmatpush1.xpose.msra.mxu0 0.0
        %1350 = vmatprep.subr.mxu0 0.0
        %1351 = vmatpush1.xpose.msra.mxu0 0.0
        %1352 = vmatprep.subr.mxu0 0.0
        %1353 = vmatpush1.xpose.msra.mxu0 0.0
        %1354 = vmatprep.subr.mxu0 0.0
        %1355 = vmatpush1.xpose.msra.mxu0 0.0
        %1356 = vmatprep.subr.mxu0 0.0
        %1357 = vmatpush1.xpose.msra.mxu0 0.0
        %1358 = vmatprep.subr.mxu0 0.0
        %1359 = vmatpush1.xpose.msra.mxu0 0.0
        %1360 = vmatprep.subr.mxu0 0.0
        %1361 = vmatpush1.xpose.msra.mxu0 0.0
        %1362 = vmatprep.subr.mxu0 0.0
        %1363 = vmatpush1.xpose.msra.mxu0 0.0
        %1364 = vmatprep.subr.mxu0 0.0
        %1365 = vmatpush1.xpose.msra.mxu0 0.0
        %1366 = vmatprep.mubr.f32.mxu0 0.0
        %1367 = vmatmul.mubr.f32.gmra.mrb[0].mxu0 %v1297
        %v1368 = vpop.f32.mrb[0].mxu0
        %v1369 = vadd.f32 0.0, %v1368
        %v1370 = vpop.f32.mrb[0].mxu0
        %1371 = vdwg.mxu0
        %v1372 = vld [vmem:[#allocation3] sm:$0xff]
        %v1373 = vld [vmem:[#allocation3 + $0x8] sm:$0xff]
        %v1374 = vld [vmem:[#allocation3 + $0x10] sm:$0xff]
        %v1375 = vld [vmem:[#allocation3 + $0x18] sm:$0xff]
        %v1376 = vsel %vm1067, %v1141, -inf
        %1377 = vmax.xlane.f32.xlu0 %v1376
        %v1378 = vpop.xlane.xlu0 %1377
        %v1379 = vsel %vm1067, %v1217, -inf
        %1380 = vmax.xlane.f32.xlu0 %v1379
        %v1381 = vpop.xlane.xlu0 %1380
        %v1382 = vsel %vm1067, %v1293, -inf
        %1383 = vmax.xlane.f32.xlu0 %v1382
        %v1384 = vpop.xlane.xlu0 %1383
        %v1385 = vsel %vm1067, %v1369, -inf
        %1386 = vmax.xlane.f32.xlu0 %v1385
        %v1387 = vpop.xlane.xlu0 %1386
        %v1388 = vmax.f32 %v1372, %v1378
        %v1389 = vmax.f32 %v1373, %v1381
        %v1390 = vmax.f32 %v1374, %v1384
        %v1391 = vmax.f32 %v1375, %v1387
        %v1392 = vsub.f32 %v1372, %v1388
        %v1393 = vsub.f32 %v1373, %v1389
        %v1394 = vsub.f32 %v1374, %v1390
        %v1395 = vsub.f32 %v1375, %v1391
        %v1396 = vmul.f32 %v1392, 1.442695
        %v1397 = vpow.pop %v1396
        %v1398 = vmul.f32 %v1393, 1.442695
        %v1399 = vpow.pop %v1398
        %v1400 = vmul.f32 %v1394, 1.442695
        %v1401 = vpow.pop %v1400
        %v1402 = vmul.f32 %v1395, 1.442695
        %v1403 = vpow.pop %v1402
        %1405 = vset.pattern.permute.xlu0 0
        %1406 = vperm.xlu0 %1405, %v1388
        %v1407 = vpop.permute.xlu0 %1406
        %1410 = vset.pattern.permute.xlu0 0
        %1411 = vperm.xlu0 %1410, %v1389
        %v1412 = vpop.permute.xlu0 %1411
        %1415 = vset.pattern.permute.xlu0 0
        %1416 = vperm.xlu0 %1415, %v1390
        %v1417 = vpop.permute.xlu0 %1416
        %1420 = vset.pattern.permute.xlu0 0
        %1421 = vperm.xlu0 %1420, %v1391
        %v1422 = vpop.permute.xlu0 %1421
        %v1424 = vsub.f32 %v1141, %v1407
        %v1425 = vsub.f32 %v1217, %v1412
        %v1426 = vsub.f32 %v1293, %v1417
        %v1427 = vsub.f32 %v1369, %v1422
        %v1428 = vmul.f32 %v1424, 1.442695
        %v1429 = vpow.pop %v1428
        %v1430 = vmul.f32 %v1425, 1.442695
        %v1431 = vpow.pop %v1430
        %v1432 = vmul.f32 %v1426, 1.442695
        %v1433 = vpow.pop %v1432
        %v1434 = vmul.f32 %v1427, 1.442695
        %v1435 = vpow.pop %v1434
        %v1436 = vld [vmem:[#allocation4] sm:$0xff]
        %v1437 = vld [vmem:[#allocation4 + $0x8] sm:$0xff]
        %v1438 = vld [vmem:[#allocation4 + $0x10] sm:$0xff]
        %v1439 = vld [vmem:[#allocation4 + $0x18] sm:$0xff]
        %v1440 = vmul.f32 %v1397, %v1436
        %v1441 = vmul.f32 %v1399, %v1437
        %v1442 = vmul.f32 %v1401, %v1438
        %v1443 = vmul.f32 %v1403, %v1439
        %v1444 = vsel %vm1067, %v1429, 0.0
        %1445 = vadd.xlane.f32.xlu0 %v1444
        %v1446 = vpop.xlane.xlu0 %1445
        %v1447 = vsel %vm1067, %v1431, 0.0
        %1448 = vadd.xlane.f32.xlu0 %v1447
        %v1449 = vpop.xlane.xlu0 %1448
        %v1450 = vsel %vm1067, %v1433, 0.0
        %1451 = vadd.xlane.f32.xlu0 %v1450
        %v1452 = vpop.xlane.xlu0 %1451
        %v1453 = vsel %vm1067, %v1435, 0.0
        %1454 = vadd.xlane.f32.xlu0 %v1453
        %v1455 = vpop.xlane.xlu0 %1454
        %v1456 = vadd.f32 %v1440, %v1446
        %v1457 = vadd.f32 %v1441, %v1449
        %v1458 = vadd.f32 %v1442, %v1452
        %v1459 = vadd.f32 %v1443, %v1455
        %vm1460 = vcmask 7168
        %1461 = vst.msk [vmem:[#allocation4] sm:$0xff] %vm1460, %v1456
        %1462 = vst.msk [vmem:[#allocation4 + $0x8] sm:$0xff] %vm1460, %v1457
        %1463 = vst.msk [vmem:[#allocation4 + $0x10] sm:$0xff] %vm1460, %v1458
        %1464 = vst.msk [vmem:[#allocation4 + $0x18] sm:$0xff] %vm1460, %v1459
        %v1465 = vld [vmem:[#allocation5] sm:$0xff]
        %v1466 = vld [vmem:[#allocation5 + $0x8] sm:$0xff]
        %v1467 = vld [vmem:[#allocation5 + $0x10] sm:$0xff]
        %v1468 = vld [vmem:[#allocation5 + $0x18] sm:$0xff]
        %1470 = vset.pattern.permute.xlu0 0
        %1471 = vperm.xlu0 %1470, %v1397
        %v1472 = vpop.permute.xlu0 %1471
        %1475 = vset.pattern.permute.xlu0 0
        %1476 = vperm.xlu0 %1475, %v1399
        %v1477 = vpop.permute.xlu0 %1476
        %1480 = vset.pattern.permute.xlu0 0
        %1481 = vperm.xlu0 %1480, %v1401
        %v1482 = vpop.permute.xlu0 %1481
        %1485 = vset.pattern.permute.xlu0 0
        %1486 = vperm.xlu0 %1485, %v1403
        %v1487 = vpop.permute.xlu0 %1486
        %v1489 = vmul.f32 %v1472, %v1465
        %v1490 = vmul.f32 %v1477, %v1466
        %v1491 = vmul.f32 %v1482, %v1467
        %v1492 = vmul.f32 %v1487, %v1468
        %v1494 = vsel %vm1067, %v1429, 0
        %1496 = vmatprep.subr.mxu0 0.0
        %1497 = vmatpush1.msra.mxu0 %v1059
        %1498 = vmatprep.subr.mxu0 0.0
        %1499 = vmatpush1.msra.mxu0 0.0
        %1500 = vmatprep.subr.mxu0 0.0
        %1501 = vmatpush1.msra.mxu0 0.0
        %1502 = vmatprep.subr.mxu0 0.0
        %1503 = vmatpush1.msra.mxu0 0.0
        %1504 = vmatprep.subr.mxu0 0.0
        %1505 = vmatpush1.msra.mxu0 0.0
        %1506 = vmatprep.subr.mxu0 0.0
        %1507 = vmatpush1.msra.mxu0 0.0
        %1508 = vmatprep.subr.mxu0 0.0
        %1509 = vmatpush1.msra.mxu0 0.0
        %1510 = vmatprep.subr.mxu0 0.0
        %1511 = vmatpush1.msra.mxu0 0.0
        %1512 = vmatprep.subr.mxu0 0.0
        %1513 = vmatpush1.msra.mxu0 0.0
        %1514 = vmatprep.subr.mxu0 0.0
        %1515 = vmatpush1.msra.mxu0 0.0
        %1516 = vmatprep.subr.mxu0 0.0
        %1517 = vmatpush1.msra.mxu0 0.0
        %1518 = vmatprep.subr.mxu0 0.0
        %1519 = vmatpush1.msra.mxu0 0.0
        %1520 = vmatprep.subr.mxu0 0.0
        %1521 = vmatpush1.msra.mxu0 0.0
        %1522 = vmatprep.subr.mxu0 0.0
        %1523 = vmatpush1.msra.mxu0 0.0
        %1524 = vmatprep.subr.mxu0 0.0
        %1525 = vmatpush1.msra.mxu0 0.0
        %1526 = vmatprep.subr.mxu0 0.0
        %1527 = vmatpush1.msra.mxu0 0.0
        %1528 = vmatprep.subr.mxu0 0.0
        %1529 = vmatpush1.msra.mxu0 0.0
        %1530 = vmatprep.subr.mxu0 0.0
        %1531 = vmatpush1.msra.mxu0 0.0
        %1532 = vmatprep.subr.mxu0 0.0
        %1533 = vmatpush1.msra.mxu0 0.0
        %1534 = vmatprep.subr.mxu0 0.0
        %1535 = vmatpush1.msra.mxu0 0.0
        %1536 = vmatprep.subr.mxu0 0.0
        %1537 = vmatpush1.msra.mxu0 0.0
        %1538 = vmatprep.subr.mxu0 0.0
        %1539 = vmatpush1.msra.mxu0 0.0
        %1540 = vmatprep.subr.mxu0 0.0
        %1541 = vmatpush1.msra.mxu0 0.0
        %1542 = vmatprep.subr.mxu0 0.0
        %1543 = vmatpush1.msra.mxu0 0.0
        %1544 = vmatprep.subr.mxu0 0.0
        %1545 = vmatpush1.msra.mxu0 0.0
        %1546 = vmatprep.subr.mxu0 0.0
        %1547 = vmatpush1.msra.mxu0 0.0
        %1548 = vmatprep.subr.mxu0 0.0
        %1549 = vmatpush1.msra.mxu0 0.0
        %1550 = vmatprep.subr.mxu0 0.0
        %1551 = vmatpush1.msra.mxu0 0.0
        %1552 = vmatprep.subr.mxu0 0.0
        %1553 = vmatpush1.msra.mxu0 0.0
        %1554 = vmatprep.subr.mxu0 0.0
        %1555 = vmatpush1.msra.mxu0 0.0
        %1556 = vmatprep.subr.mxu0 0.0
        %1557 = vmatpush1.msra.mxu0 0.0
        %1558 = vmatprep.subr.mxu0 0.0
        %1559 = vmatpush1.msra.mxu0 0.0
        %1560 = vmatprep.mubr.f32.mxu0 0.0
        %1561 = vmatmul.mubr.f32.gmra.mrb[0].mxu0 %v1494
        %v1562 = vpop.f32.mrb[0].mxu0
        %v1563 = vadd.f32 0.0, %v1562
        %v1564 = vpop.f32.mrb[0].mxu0
        %1565 = vdwg.mxu0
        %v1567 = vsel %vm1067, %v1431, 0
        %1569 = vmatprep.subr.mxu0 0.0
        %1570 = vmatpush1.msra.mxu0 %v1060
        %1571 = vmatprep.subr.mxu0 0.0
        %1572 = vmatpush1.msra.mxu0 0.0
        %1573 = vmatprep.subr.mxu0 0.0
        %1574 = vmatpush1.msra.mxu0 0.0
        %1575 = vmatprep.subr.mxu0 0.0
        %1576 = vmatpush1.msra.mxu0 0.0
        %1577 = vmatprep.subr.mxu0 0.0
        %1578 = vmatpush1.msra.mxu0 0.0
        %1579 = vmatprep.subr.mxu0 0.0
        %1580 = vmatpush1.msra.mxu0 0.0
        %1581 = vmatprep.subr.mxu0 0.0
        %1582 = vmatpush1.msra.mxu0 0.0
        %1583 = vmatprep.subr.mxu0 0.0
        %1584 = vmatpush1.msra.mxu0 0.0
        %1585 = vmatprep.subr.mxu0 0.0
        %1586 = vmatpush1.msra.mxu0 0.0
        %1587 = vmatprep.subr.mxu0 0.0
        %1588 = vmatpush1.msra.mxu0 0.0
        %1589 = vmatprep.subr.mxu0 0.0
        %1590 = vmatpush1.msra.mxu0 0.0
        %1591 = vmatprep.subr.mxu0 0.0
        %1592 = vmatpush1.msra.mxu0 0.0
        %1593 = vmatprep.subr.mxu0 0.0
        %1594 = vmatpush1.msra.mxu0 0.0
        %1595 = vmatprep.subr.mxu0 0.0
        %1596 = vmatpush1.msra.mxu0 0.0
        %1597 = vmatprep.subr.mxu0 0.0
        %1598 = vmatpush1.msra.mxu0 0.0
        %1599 = vmatprep.subr.mxu0 0.0
        %1600 = vmatpush1.msra.mxu0 0.0
        %1601 = vmatprep.subr.mxu0 0.0
        %1602 = vmatpush1.msra.mxu0 0.0
        %1603 = vmatprep.subr.mxu0 0.0
        %1604 = vmatpush1.msra.mxu0 0.0
        %1605 = vmatprep.subr.mxu0 0.0
        %1606 = vmatpush1.msra.mxu0 0.0
        %1607 = vmatprep.subr.mxu0 0.0
        %1608 = vmatpush1.msra.mxu0 0.0
        %1609 = vmatprep.subr.mxu0 0.0
        %1610 = vmatpush1.msra.mxu0 0.0
        %1611 = vmatprep.subr.mxu0 0.0
        %1612 = vmatpush1.msra.mxu0 0.0
        %1613 = vmatprep.subr.mxu0 0.0
        %1614 = vmatpush1.msra.mxu0 0.0
        %1615 = vmatprep.subr.mxu0 0.0
        %1616 = vmatpush1.msra.mxu0 0.0
        %1617 = vmatprep.subr.mxu0 0.0
        %1618 = vmatpush1.msra.mxu0 0.0
        %1619 = vmatprep.subr.mxu0 0.0
        %1620 = vmatpush1.msra.mxu0 0.0
        %1621 = vmatprep.subr.mxu0 0.0
        %1622 = vmatpush1.msra.mxu0 0.0
        %1623 = vmatprep.subr.mxu0 0.0
        %1624 = vmatpush1.msra.mxu0 0.0
        %1625 = vmatprep.subr.mxu0 0.0
        %1626 = vmatpush1.msra.mxu0 0.0
        %1627 = vmatprep.subr.mxu0 0.0
        %1628 = vmatpush1.msra.mxu0 0.0
        %1629 = vmatprep.subr.mxu0 0.0
        %1630 = vmatpush1.msra.mxu0 0.0
        %1631 = vmatprep.subr.mxu0 0.0
        %1632 = vmatpush1.msra.mxu0 0.0
        %1633 = vmatprep.mubr.f32.mxu0 0.0
        %1634 = vmatmul.mubr.f32.gmra.mrb[0].mxu0 %v1567
        %v1635 = vpop.f32.mrb[0].mxu0
        %v1636 = vadd.f32 0.0, %v1635
        %v1637 = vpop.f32.mrb[0].mxu0
        %1638 = vdwg.mxu0
        %v1640 = vsel %vm1067, %v1433, 0
        %1642 = vmatprep.subr.mxu0 0.0
        %1643 = vmatpush1.msra.mxu0 %v1061
        %1644 = vmatprep.subr.mxu0 0.0
        %1645 = vmatpush1.msra.mxu0 0.0
        %1646 = vmatprep.subr.mxu0 0.0
        %1647 = vmatpush1.msra.mxu0 0.0
        %1648 = vmatprep.subr.mxu0 0.0
        %1649 = vmatpush1.msra.mxu0 0.0
        %1650 = vmatprep.subr.mxu0 0.0
        %1651 = vmatpush1.msra.mxu0 0.0
        %1652 = vmatprep.subr.mxu0 0.0
        %1653 = vmatpush1.msra.mxu0 0.0
        %1654 = vmatprep.subr.mxu0 0.0
        %1655 = vmatpush1.msra.mxu0 0.0
        %1656 = vmatprep.subr.mxu0 0.0
        %1657 = vmatpush1.msra.mxu0 0.0
        %1658 = vmatprep.subr.mxu0 0.0
        %1659 = vmatpush1.msra.mxu0 0.0
        %1660 = vmatprep.subr.mxu0 0.0
        %1661 = vmatpush1.msra.mxu0 0.0
        %1662 = vmatprep.subr.mxu0 0.0
        %1663 = vmatpush1.msra.mxu0 0.0
        %1664 = vmatprep.subr.mxu0 0.0
        %1665 = vmatpush1.msra.mxu0 0.0
        %1666 = vmatprep.subr.mxu0 0.0
        %1667 = vmatpush1.msra.mxu0 0.0
        %1668 = vmatprep.subr.mxu0 0.0
        %1669 = vmatpush1.msra.mxu0 0.0
        %1670 = vmatprep.subr.mxu0 0.0
        %1671 = vmatpush1.msra.mxu0 0.0
        %1672 = vmatprep.subr.mxu0 0.0
        %1673 = vmatpush1.msra.mxu0 0.0
        %1674 = vmatprep.subr.mxu0 0.0
        %1675 = vmatpush1.msra.mxu0 0.0
        %1676 = vmatprep.subr.mxu0 0.0
        %1677 = vmatpush1.msra.mxu0 0.0
        %1678 = vmatprep.subr.mxu0 0.0
        %1679 = vmatpush1.msra.mxu0 0.0
        %1680 = vmatprep.subr.mxu0 0.0
        %1681 = vmatpush1.msra.mxu0 0.0
        %1682 = vmatprep.subr.mxu0 0.0
        %1683 = vmatpush1.msra.mxu0 0.0
        %1684 = vmatprep.subr.mxu0 0.0
        %1685 = vmatpush1.msra.mxu0 0.0
        %1686 = vmatprep.subr.mxu0 0.0
        %1687 = vmatpush1.msra.mxu0 0.0
        %1688 = vmatprep.subr.mxu0 0.0
        %1689 = vmatpush1.msra.mxu0 0.0
        %1690 = vmatprep.subr.mxu0 0.0
        %1691 = vmatpush1.msra.mxu0 0.0
        %1692 = vmatprep.subr.mxu0 0.0
        %1693 = vmatpush1.msra.mxu0 0.0
        %1694 = vmatprep.subr.mxu0 0.0
        %1695 = vmatpush1.msra.mxu0 0.0
        %1696 = vmatprep.subr.mxu0 0.0
        %1697 = vmatpush1.msra.mxu0 0.0
        %1698 = vmatprep.subr.mxu0 0.0
        %1699 = vmatpush1.msra.mxu0 0.0
        %1700 = vmatprep.subr.mxu0 0.0
        %1701 = vmatpush1.msra.mxu0 0.0
        %1702 = vmatprep.subr.mxu0 0.0
        %1703 = vmatpush1.msra.mxu0 0.0
        %1704 = vmatprep.subr.mxu0 0.0
        %1705 = vmatpush1.msra.mxu0 0.0
        %1706 = vmatprep.mubr.f32.mxu0 0.0
        %1707 = vmatmul.mubr.f32.gmra.mrb[0].mxu0 %v1640
        %v1708 = vpop.f32.mrb[0].mxu0
        %v1709 = vadd.f32 0.0, %v1708
        %v1710 = vpop.f32.mrb[0].mxu0
        %1711 = vdwg.mxu0
        %v1713 = vsel %vm1067, %v1435, 0
        %1715 = vmatprep.subr.mxu0 0.0
        %1716 = vmatpush1.msra.mxu0 %v1062
        %1717 = vmatprep.subr.mxu0 0.0
        %1718 = vmatpush1.msra.mxu0 0.0
        %1719 = vmatprep.subr.mxu0 0.0
        %1720 = vmatpush1.msra.mxu0 0.0
        %1721 = vmatprep.subr.mxu0 0.0
        %1722 = vmatpush1.msra.mxu0 0.0
        %1723 = vmatprep.subr.mxu0 0.0
        %1724 = vmatpush1.msra.mxu0 0.0
        %1725 = vmatprep.subr.mxu0 0.0
        %1726 = vmatpush1.msra.mxu0 0.0
        %1727 = vmatprep.subr.mxu0 0.0
        %1728 = vmatpush1.msra.mxu0 0.0
        %1729 = vmatprep.subr.mxu0 0.0
        %1730 = vmatpush1.msra.mxu0 0.0
        %1731 = vmatprep.subr.mxu0 0.0
        %1732 = vmatpush1.msra.mxu0 0.0
        %1733 = vmatprep.subr.mxu0 0.0
        %1734 = vmatpush1.msra.mxu0 0.0
        %1735 = vmatprep.subr.mxu0 0.0
        %1736 = vmatpush1.msra.mxu0 0.0
        %1737 = vmatprep.subr.mxu0 0.0
        %1738 = vmatpush1.msra.mxu0 0.0
        %1739 = vmatprep.subr.mxu0 0.0
        %1740 = vmatpush1.msra.mxu0 0.0
        %1741 = vmatprep.subr.mxu0 0.0
        %1742 = vmatpush1.msra.mxu0 0.0
        %1743 = vmatprep.subr.mxu0 0.0
        %1744 = vmatpush1.msra.mxu0 0.0
        %1745 = vmatprep.subr.mxu0 0.0
        %1746 = vmatpush1.msra.mxu0 0.0
        %1747 = vmatprep.subr.mxu0 0.0
        %1748 = vmatpush1.msra.mxu0 0.0
        %1749 = vmatprep.subr.mxu0 0.0
        %1750 = vmatpush1.msra.mxu0 0.0
        %1751 = vmatprep.subr.mxu0 0.0
        %1752 = vmatpush1.msra.mxu0 0.0
        %1753 = vmatprep.subr.mxu0 0.0
        %1754 = vmatpush1.msra.mxu0 0.0
        %1755 = vmatprep.subr.mxu0 0.0
        %1756 = vmatpush1.msra.mxu0 0.0
        %1757 = vmatprep.subr.mxu0 0.0
        %1758 = vmatpush1.msra.mxu0 0.0
        %1759 = vmatprep.subr.mxu0 0.0
        %1760 = vmatpush1.msra.mxu0 0.0
        %1761 = vmatprep.subr.mxu0 0.0
        %1762 = vmatpush1.msra.mxu0 0.0
        %1763 = vmatprep.subr.mxu0 0.0
        %1764 = vmatpush1.msra.mxu0 0.0
        %1765 = vmatprep.subr.mxu0 0.0
        %1766 = vmatpush1.msra.mxu0 0.0
        %1767 = vmatprep.subr.mxu0 0.0
        %1768 = vmatpush1.msra.mxu0 0.0
        %1769 = vmatprep.subr.mxu0 0.0
        %1770 = vmatpush1.msra.mxu0 0.0
        %1771 = vmatprep.subr.mxu0 0.0
        %1772 = vmatpush1.msra.mxu0 0.0
        %1773 = vmatprep.subr.mxu0 0.0
        %1774 = vmatpush1.msra.mxu0 0.0
        %1775 = vmatprep.subr.mxu0 0.0
        %1776 = vmatpush1.msra.mxu0 0.0
        %1777 = vmatprep.subr.mxu0 0.0
        %1778 = vmatpush1.msra.mxu0 0.0
        %1779 = vmatprep.mubr.f32.mxu0 0.0
        %1780 = vmatmul.mubr.f32.gmra.mrb[0].mxu0 %v1713
        %v1781 = vpop.f32.mrb[0].mxu0
        %v1782 = vadd.f32 0.0, %v1781
        %v1783 = vpop.f32.mrb[0].mxu0
        %1784 = vdwg.mxu0
        %v1785 = vadd.f32 %v1489, %v1563
        %v1786 = vadd.f32 %v1490, %v1636
        %v1787 = vadd.f32 %v1491, %v1709
        %v1788 = vadd.f32 %v1492, %v1782
        %1789 = vst.msk [vmem:[#allocation5] sm:$0xff] %vm1067, %v1785
        %1790 = vst.msk [vmem:[#allocation5 + $0x8] sm:$0xff] %vm1067, %v1786
        %1791 = vst.msk [vmem:[#allocation5 + $0x10] sm:$0xff] %vm1067, %v1787
        %1792 = vst.msk [vmem:[#allocation5 + $0x18] sm:$0xff] %vm1067, %v1788
        %1793 = vst.msk [vmem:[#allocation3] sm:$0xff] %vm1460, %v1388
        %1794 = vst.msk [vmem:[#allocation3 + $0x8] sm:$0xff] %vm1460, %v1389
        %1795 = vst.msk [vmem:[#allocation3 + $0x10] sm:$0xff] %vm1460, %v1390
        %1796 = vst.msk [vmem:[#allocation3 + $0x18] sm:$0xff] %vm1460, %v1391
        // Predicated region
        $region77: #{tpu_custom_call.1} parent=51 // pred_check
          %p1797 = pneg %p428
        $region78: #{tpu_custom_call.1} parent=51 // pred_check_branch
          %1799 = sbr.rel (%p1797) target = $region80
        $region79: #{tpu_custom_call.1} parent=51 // pred_region
          %v1800 = vld [vmem:[#allocation4] sm:$0xff]
          %v1801 = vld [vmem:[#allocation4 + $0x8] sm:$0xff]
          %v1802 = vld [vmem:[#allocation4 + $0x10] sm:$0xff]
          %v1803 = vld [vmem:[#allocation4 + $0x18] sm:$0xff]
          %v1804 = vrcp.pop %v1800
          %v1805 = vrcp.pop %v1801
          %v1806 = vrcp.pop %v1802
          %v1807 = vrcp.pop %v1803
          %v1808 = vld [vmem:[#allocation5] sm:$0xff]
          %v1809 = vld [vmem:[#allocation5 + $0x8] sm:$0xff]
          %v1810 = vld [vmem:[#allocation5 + $0x10] sm:$0xff]
          %v1811 = vld [vmem:[#allocation5 + $0x18] sm:$0xff]
          %1813 = vset.pattern.permute.xlu0 0
          %1814 = vperm.xlu0 %1813, %v1804
          %v1815 = vpop.permute.xlu0 %1814
          %1818 = vset.pattern.permute.xlu0 0
          %1819 = vperm.xlu0 %1818, %v1805
          %v1820 = vpop.permute.xlu0 %1819
          %1823 = vset.pattern.permute.xlu0 0
          %1824 = vperm.xlu0 %1823, %v1806
          %v1825 = vpop.permute.xlu0 %1824
          %1828 = vset.pattern.permute.xlu0 0
          %1829 = vperm.xlu0 %1828, %v1807
          %v1830 = vpop.permute.xlu0 %1829
          %v1832 = vmul.f32 %v1808, %v1815
          %v1833 = vmul.f32 %v1809, %v1820
          %v1834 = vmul.f32 %v1810, %v1825
          %v1835 = vmul.f32 %v1811, %v1830
          %v1836 = vcombine.low %v1832, %v1834
          %v1837 = vcombine.high %v1832, %v1834
          %v1839 = vunpack.c.l.s4 1983009808
          %v1840 = vunpack.c.0.s8 %v1839
          %v1841 = vlaneseq
          %v1842 = vshrl.u32 %v1841, 7
          %v1843 = vsub.s32 %v1840, %v1842
          %v1844 = vrot.slane %v1836, %v1843
          %v1846 = vunpack.c.l.s4 1983009808
          %v1847 = vunpack.c.0.s8 %v1846
          %v1848 = vlaneseq
          %v1849 = vshrl.u32 %v1848, 7
          %v1850 = vsub.s32 %v1847, %v1849
          %v1851 = vrot.slane %v1837, %v1850
          %v1852 = vcombine.low %v1833, %v1835
          %v1853 = vcombine.high %v1833, %v1835
          %v1855 = vunpack.c.l.s4 1983009808
          %v1856 = vunpack.c.0.s8 %v1855
          %v1857 = vlaneseq
          %v1858 = vshrl.u32 %v1857, 7
          %v1859 = vsub.s32 %v1856, %v1858
          %v1860 = vrot.slane %v1852, %v1859
          %v1862 = vunpack.c.l.s4 1983009808
          %v1863 = vunpack.c.0.s8 %v1862
          %v1864 = vlaneseq
          %v1865 = vshrl.u32 %v1864, 7
          %v1866 = vsub.s32 %v1863, %v1865
          %v1867 = vrot.slane %v1853, %v1866
          %v1868 = vcombine.low %v1844, %v1860
          %v1869 = vcombine.high %v1844, %v1860
          %v1871 = vunpack.c.l.s4 1934713408
          %v1872 = vunpack.c.0.s8 %v1871
          %v1873 = vlaneseq
          %v1874 = vshrl.u32 %v1873, 7
          %v1875 = vsub.s32 %v1872, %v1874
          %v1876 = vrot.slane %v1868, %v1875
          %v1878 = vunpack.c.l.s4 1934713408
          %v1879 = vunpack.c.0.s8 %v1878
          %v1880 = vlaneseq
          %v1881 = vshrl.u32 %v1880, 7
          %v1882 = vsub.s32 %v1879, %v1881
          %v1883 = vrot.slane %v1869, %v1882
          %v1884 = vcombine.low %v1851, %v1867
          %v1885 = vcombine.high %v1851, %v1867
          %v1887 = vunpack.c.l.s4 1934713408
          %v1888 = vunpack.c.0.s8 %v1887
          %v1889 = vlaneseq
          %v1890 = vshrl.u32 %v1889, 7
          %v1891 = vsub.s32 %v1888, %v1890
          %v1892 = vrot.slane %v1884, %v1891
          %v1894 = vunpack.c.l.s4 1934713408
          %v1895 = vunpack.c.0.s8 %v1894
          %v1896 = vlaneseq
          %v1897 = vshrl.u32 %v1896, 7
          %v1898 = vsub.s32 %v1895, %v1897
          %v1899 = vrot.slane %v1885, %v1898
          %v1900 = vcombine.high %v1876, 0.0
          %v1901 = vcombine.high %v1883, 0.0
          %v1902 = vcombine.high %v1892, 0.0
          %v1903 = vcombine.high %v1899, 0.0
          %v1904 = vcombine.low %v1876, %v1883
          %v1906 = vunpack.c.l.s4 1983009808
          %v1907 = vunpack.c.0.s8 %v1906
          %v1908 = vlaneseq
          %v1909 = vshrl.u32 %v1908, 7
          %v1910 = vsub.s32 %v1907, %v1909
          %v1911 = vrot.slane %v1904, %v1910
          %v1912 = vcombine.low %v1900, %v1901
          %v1914 = vunpack.c.l.s4 1983009808
          %v1915 = vunpack.c.0.s8 %v1914
          %v1916 = vlaneseq
          %v1917 = vshrl.u32 %v1916, 7
          %v1918 = vsub.s32 %v1915, %v1917
          %v1919 = vrot.slane %v1912, %v1918
          %v1920 = vcombine.low %v1892, %v1899
          %v1922 = vunpack.c.l.s4 1983009808
          %v1923 = vunpack.c.0.s8 %v1922
          %v1924 = vlaneseq
          %v1925 = vshrl.u32 %v1924, 7
          %v1926 = vsub.s32 %v1923, %v1925
          %v1927 = vrot.slane %v1920, %v1926
          %v1928 = vcombine.low %v1902, %v1903
          %v1930 = vunpack.c.l.s4 1983009808
          %v1931 = vunpack.c.0.s8 %v1930
          %v1932 = vlaneseq
          %v1933 = vshrl.u32 %v1932, 7
          %v1934 = vsub.s32 %v1931, %v1933
          %v1935 = vrot.slane %v1928, %v1934
          %v1936 = vcombine.low %v1911, %v1919
          %v1937 = vcombine.high %v1911, %v1919
          %v1939 = vunpack.c.l.s4 1934713408
          %v1940 = vunpack.c.0.s8 %v1939
          %v1941 = vlaneseq
          %v1942 = vshrl.u32 %v1941, 7
          %v1943 = vsub.s32 %v1940, %v1942
          %v1944 = vrot.slane %v1936, %v1943
          %v1946 = vunpack.c.l.s4 1934713408
          %v1947 = vunpack.c.0.s8 %v1946
          %v1948 = vlaneseq
          %v1949 = vshrl.u32 %v1948, 7
          %v1950 = vsub.s32 %v1947, %v1949
          %v1951 = vrot.slane %v1937, %v1950
          %v1952 = vcombine.low %v1927, %v1935
          %v1953 = vcombine.high %v1927, %v1935
          %v1955 = vunpack.c.l.s4 1934713408
          %v1956 = vunpack.c.0.s8 %v1955
          %v1957 = vlaneseq
          %v1958 = vshrl.u32 %v1957, 7
          %v1959 = vsub.s32 %v1956, %v1958
          %v1960 = vrot.slane %v1952, %v1959
          %v1962 = vunpack.c.l.s4 1934713408
          %v1963 = vunpack.c.0.s8 %v1962
          %v1964 = vlaneseq
          %v1965 = vshrl.u32 %v1964, 7
          %v1966 = vsub.s32 %v1963, %v1965
          %v1967 = vrot.slane %v1953, %v1966
          %v1968 = vcombine.low %v1944, %v1960
          %v1969 = vcombine.high %v1944, %v1960
          %v1970 = vcombine.low %v1951, %v1967
          %v1971 = vcombine.high %v1951, %v1967
          %1973 = vrot.lane.b32.xlu0 %v1969, 8
          %v1974 = vpop.permute.xlu0 %1973
          %1977 = vrot.lane.b32.xlu0 %v1970, 16
          %v1978 = vpop.permute.xlu0 %1977
          %1981 = vrot.lane.b32.xlu0 %v1971, 24
          %v1982 = vpop.permute.xlu0 %1981
          %v1984 = vsel %vm1067, %v1968, %v1974
          %vm1985 = vcmask 130048
          %v1986 = vsel %vm1985, %v1984, %v1978
          %vm1987 = vcmask 195584
          %v1988 = vsel %vm1987, %v1986, %v1982
          %v1989 = vld [vmem:[#allocation14] sm:$0xff]
          %v1990 = vld [vmem:[#allocation14 + $0x8] sm:$0xff]
          %v1991 = vld [vmem:[#allocation14 + $0x10] sm:$0xff]
          %v1992 = vld [vmem:[#allocation14 + $0x18] sm:$0xff]
          %v1993 = vld [vmem:[%s7] sm:$0x1]
          %v1995 = vlaneseq
          %v1996 = vshrl.u32 %v1995, 7
          %v1997 = vsub.s32 0, %v1996
          %v1998 = vrot.slane %v1993, %v1997
          %v2001 = vsel %vm695, %v1988, 0
          %2003 = vmatprep.subr.mxu0 0.0
          %2004 = vmatpush1.msra.mxu0 %v1989
          %2005 = vmatprep.subr.mxu0 0.0
          %2006 = vmatpush1.msra.mxu0 %v1990
          %2007 = vmatprep.subr.mxu0 0.0
          %2008 = vmatpush1.msra.mxu0 %v1991
          %2009 = vmatprep.subr.mxu0 0.0
          %2010 = vmatpush1.msra.mxu0 %v1992
          %2011 = vmatprep.subr.mxu0 0.0
          %2012 = vmatpush1.msra.mxu0 0.0
          %2013 = vmatprep.subr.mxu0 0.0
          %2014 = vmatpush1.msra.mxu0 0.0
          %2015 = vmatprep.subr.mxu0 0.0
          %2016 = vmatpush1.msra.mxu0 0.0
          %2017 = vmatprep.subr.mxu0 0.0
          %2018 = vmatpush1.msra.mxu0 0.0
          %2019 = vmatprep.subr.mxu0 0.0
          %2020 = vmatpush1.msra.mxu0 0.0
          %2021 = vmatprep.subr.mxu0 0.0
          %2022 = vmatpush1.msra.mxu0 0.0
          %2023 = vmatprep.subr.mxu0 0.0
          %2024 = vmatpush1.msra.mxu0 0.0
          %2025 = vmatprep.subr.mxu0 0.0
          %2026 = vmatpush1.msra.mxu0 0.0
          %2027 = vmatprep.subr.mxu0 0.0
          %2028 = vmatpush1.msra.mxu0 0.0
          %2029 = vmatprep.subr.mxu0 0.0
          %2030 = vmatpush1.msra.mxu0 0.0
          %2031 = vmatprep.subr.mxu0 0.0
          %2032 = vmatpush1.msra.mxu0 0.0
          %2033 = vmatprep.subr.mxu0 0.0
          %2034 = vmatpush1.msra.mxu0 0.0
          %2035 = vmatprep.subr.mxu0 0.0
          %2036 = vmatpush1.msra.mxu0 0.0
          %2037 = vmatprep.subr.mxu0 0.0
          %2038 = vmatpush1.msra.mxu0 0.0
          %2039 = vmatprep.subr.mxu0 0.0
          %2040 = vmatpush1.msra.mxu0 0.0
          %2041 = vmatprep.subr.mxu0 0.0
          %2042 = vmatpush1.msra.mxu0 0.0
          %2043 = vmatprep.subr.mxu0 0.0
          %2044 = vmatpush1.msra.mxu0 0.0
          %2045 = vmatprep.subr.mxu0 0.0
          %2046 = vmatpush1.msra.mxu0 0.0
          %2047 = vmatprep.subr.mxu0 0.0
          %2048 = vmatpush1.msra.mxu0 0.0
          %2049 = vmatprep.subr.mxu0 0.0
          %2050 = vmatpush1.msra.mxu0 0.0
          %2051 = vmatprep.subr.mxu0 0.0
          %2052 = vmatpush1.msra.mxu0 0.0
          %2053 = vmatprep.subr.mxu0 0.0
          %2054 = vmatpush1.msra.mxu0 0.0
          %2055 = vmatprep.subr.mxu0 0.0
          %2056 = vmatpush1.msra.mxu0 0.0
          %2057 = vmatprep.subr.mxu0 0.0
          %2058 = vmatpush1.msra.mxu0 0.0
          %2059 = vmatprep.subr.mxu0 0.0
          %2060 = vmatpush1.msra.mxu0 0.0
          %2061 = vmatprep.subr.mxu0 0.0
          %2062 = vmatpush1.msra.mxu0 0.0
          %2063 = vmatprep.subr.mxu0 0.0
          %2064 = vmatpush1.msra.mxu0 0.0
          %2065 = vmatprep.subr.mxu0 0.0
          %2066 = vmatpush1.msra.mxu0 0.0
          %2067 = vmatprep.mubr.f32.mxu0 0.0
          %2068 = vmatmul.mubr.f32.gmra.mrb[0].mxu0 %v2001
          %v2069 = vpop.f32.mrb[0].mxu0
          %v2070 = vadd.f32 %v1998, %v2069
          %v2071 = vpop.f32.mrb[0].mxu0
          %2072 = vdwg.mxu0
          %2073 = vst.msk [vmem:[%s427] sm:$0xff] %vm695, %v2070
        $region80: #{tpu_custom_call.1} parent=51 // pred_fallthru
          _
        %s2074 = sand.u32 %s240, 1
        %s2075 = scalar_lea.sflag [#allocation8], %s2074
        %s2076 = sand.u32 %s240, 1
        %s2077 = smul.addr %s2076, 8
        %s2078 = scalar_lea.vmem [#allocation15], %s2077
        // Predicated region
        $region81: #{tpu_custom_call.1} parent=51 // pred_check
          %p2079 = pneg %p250
        $region82: #{tpu_custom_call.1} parent=51 // pred_check_branch
          %2081 = sbr.rel (%p2079) target = $region84
        $region83: #{tpu_custom_call.1} parent=51 // pred_region
          %s2083 = ssub.s32 128, 128
          %2084 = vsyncadd %s2075, %s2083
          %s2085 = sadd.s32 %s35, %s34
          %s2086 = smul.addr %s2085, 128
          %s2087 = scalar_lea.hbm %s8, %s2086
          %s2089 = sshll.u32 %s2078, 4
          %s2090 = int_to_ptr.vmem [resolvable:$true] %s2089
          %2092 = dma.vmem_to_hbm [thread:$0]  %s2090, 128, %s2087, %s2075
        $region84: #{tpu_custom_call.1} parent=51 // pred_fallthru
          _
      $region52: #{tpu_custom_call.1} parent=5 // pred_fallthru
        _
      %p2093 = scmp.le.s32.totalorder 2, %s24
      // Predicated region
      $region85: #{tpu_custom_call.1} parent=5 // pred_check
        %p2094 = pneg %p2093
      $region86: #{tpu_custom_call.1} parent=5 // pred_check_branch
        %2096 = sbr.rel (%p2094) target = $region88
      $region87: #{tpu_custom_call.1} parent=5 // pred_region
        %s2097 = ssub.s32 %s24, 2
        // Predicated region
        $region89: #{tpu_custom_call.1} parent=87 // pred_check
          %p2098 = pneg %p256
        $region90: #{tpu_custom_call.1} parent=87 // pred_check_branch
          %2100 = sbr.rel (%p2098) target = $region92
        $region91: #{tpu_custom_call.1} parent=87 // pred_region
          %s2101 = sand.u32 %s241, 1
          %s2102 = scalar_lea.sflag [#allocation8], %s2101
          %s2103 = sand.u32 %s241, 1
          %s2104 = smul.addr %s2103, 8
          %s2105 = scalar_lea.vmem [#allocation15], %s2104
          %2106 = dma.done %s2102, 128
        $region92: #{tpu_custom_call.1} parent=87 // pred_fallthru
          _
      $region88: #{tpu_custom_call.1} parent=5 // pred_fallthru
        _
    $region6: #{tpu_custom_call.1} parent=1 // loop_footer
      %s28 = sadd.s32 1, %s24
    $region7: #{tpu_custom_call.1} parent=1 // loop_footer_branch
      %23 = sbr.rel target = $region3
    $region8: #{tpu_custom_call.1} parent=1 // loop_exit
      _
    %2107 = vsyncpa [#allocation7], 1
    %s2108 = scalar_lea.sflag [#allocation7], 1
    %2109 = vsyncpa %s2108, 1
    %2110 = vsyncpa [#allocation10], 1
    %s2111 = scalar_lea.sflag [#allocation10], 1
    %2112 = vsyncpa %s2111, 1
    %2113 = vsyncpa [#allocation13], 1
    %2114 = vsyncpa [#allocation8], 1
    %s2115 = scalar_lea.sflag [#allocation8], 1
    %2116 = vsyncpa %s2115, 1

</llo_original>
